<compile_context>
chip_gen: v5e
topology: v5e:2x2
jax: 0.10.0
libtpu: 0.0.40
codegen_flags: <defaults>
</compile_context>

<pallas_src>
import functools

import jax
import jax.numpy as jnp
from jax import lax
from jax.experimental import pallas as pl
from jax.experimental.pallas import tpu as pltpu


# ----------------------------- Fused Pallas kernel -----------------------------

def _surel_fused_kernel(
        x_ref,                                      # (1, L*P*Np, 2*wl) bf16, time-major rows
        w1_ref, b1_ref, w2_ref, b2_ref,             # embedder MLP (weights bf16, biases f32)
        wih0_ref, whh0_ref, bl0_ref,                # LSTM layer 0, gate-fused (E, 4E)
        wih1_ref, whh1_ref, bl1_ref,                # LSTM layer 1, gate-fused (E, 4E)
        w3_ref, b3_ref, w4_ref, b4_ref,             # lp head (w4/b4 lane-padded to 128)
        o_ref,                                      # (1, P, 128)
        xg_ref,                                     # VMEM scratch (L, P*Np, 4E) f32
        *, L, Np, P, E):
    f32 = jnp.float32
    bf16 = jnp.bfloat16
    PNp = P * Np

    # ---- embedder MLP over all L*P*Np rows (Dropout = identity at inference) ----
    x = x_ref[0]                                                         # (L*PNp, 2*wl) bf16
    h = jnp.dot(x, w1_ref[...], preferred_element_type=f32) + b1_ref[...]
    h = jnp.maximum(h, 0.0)
    h = jnp.dot(h.astype(bf16), w2_ref[...], preferred_element_type=f32) + b2_ref[...]
    h = jnp.maximum(h, 0.0)                                              # (L*PNp, E) f32

    # ---- hoisted LSTM layer-0 input projection: ONE lane-dense (.,E)@(E,4E) matmul,
    #      stored time-major so the per-step load is a clean block index xg[t].
    g_all = jnp.dot(h.astype(bf16), wih0_ref[...],
                    preferred_element_type=f32) + bl0_ref[...]           # (L*PNp, 4E)
    xg_ref[...] = g_all.reshape(L, PNp, 4 * E)

    # ---- 2-layer LSTM recurrence: one fused-gate matmul per layer per step; gate
    #      extraction + sigmoid/tanh + cell updates stay in f32 on the VPU/EUP.
    def step(t, carry):
        h0, c0, h1, c1 = carry

        g0 = xg_ref[t] + jnp.dot(h0.astype(bf16), whh0_ref[...],
                                 preferred_element_type=f32)             # (PNp, 4E)
        i0 = jax.nn.sigmoid(g0[:, 0 * E:1 * E])
        f0 = jax.nn.sigmoid(g0[:, 1 * E:2 * E])
        gg0 = jnp.tanh(g0[:, 2 * E:3 * E])
        o0 = jax.nn.sigmoid(g0[:, 3 * E:4 * E])
        c0n = f0 * c0 + i0 * gg0
        h0n = o0 * jnp.tanh(c0n)

        g1 = (jnp.dot(h0n.astype(bf16), wih1_ref[...], preferred_element_type=f32)
              + jnp.dot(h1.astype(bf16), whh1_ref[...], preferred_element_type=f32)
              + bl1_ref[...])                                            # (PNp, 4E)
        i1 = jax.nn.sigmoid(g1[:, 0 * E:1 * E])
        f1 = jax.nn.sigmoid(g1[:, 1 * E:2 * E])
        gg1 = jnp.tanh(g1[:, 2 * E:3 * E])
        o1 = jax.nn.sigmoid(g1[:, 3 * E:4 * E])
        c1n = f1 * c1 + i1 * gg1
        h1n = o1 * jnp.tanh(c1n)
        return (h0n, c0n, h1n, c1n)

    zeros = jnp.zeros((PNp, E), f32)
    # Full unroll only for short sequences; wide batched tiles + deep unroll would spill.
    _, _, h1, _ = lax.fori_loop(0, L, step, (zeros, zeros, zeros, zeros),
                                unroll=True if L <= 8 else 2)

    # ---- head: per-pair mean over the Np walk rows (sublane reduce, MXU stays free),
    #      then Linear->ReLU->Linear with a lane-dense 128-wide (zero-padded) output.
    z = jnp.mean(h1.reshape(P, Np, E), axis=1)                           # (P, E)
    hh = jnp.dot(z.astype(bf16), w3_ref[...], preferred_element_type=f32) + b3_ref[...]
    hh = jnp.maximum(hh, 0.0)
    out = jnp.dot(hh.astype(bf16), w4_ref[...],
                  preferred_element_type=f32) + b4_ref[...]              # (P, 128)
    o_ref[0] = out


def surel_fused_forward(x_blocks, wp, *, P, Np, L, Din):
    n_blocks = x_blocks.shape[0]
    E = wp["w2"].shape[1]
    PNp = P * Np

    kern = functools.partial(_surel_fused_kernel, L=L, Np=Np, P=P, E=E)

    def wspec(a):
        return pl.BlockSpec(a.shape, lambda b: (0, 0))

    weight_keys = ("w1", "b1", "w2", "b2",
                   "wih0", "whh0", "bl0",
                   "wih1", "whh1", "bl1",
                   "w3", "b3", "w4", "b4")

    grid_spec = pltpu.PrefetchScalarGridSpec(
        num_scalar_prefetch=0,
        grid=(n_blocks,),
        in_specs=[pl.BlockSpec((1, L * PNp, Din), lambda b: (b, 0, 0))]
                 + [wspec(wp[k]) for k in weight_keys],
        out_specs=pl.BlockSpec((1, P, 128), lambda b: (b, 0, 0)),
        scratch_shapes=[pltpu.VMEM((L, PNp, 4 * E), jnp.float32)],
    )
    out = pl.pallas_call(
        kern,
        out_shape=jax.ShapeDtypeStruct((n_blocks, P, 128), jnp.float32),
        grid_spec=grid_spec,
        compiler_params=pltpu.CompilerParams(
            dimension_semantics=("parallel",),
            # Explicit cap: safe on v5e/v6e (128 MiB) and v7x (64 MiB physical / 32 scoped);
            # actual usage (input block + (L,P*Np,4E) scratch) is far below this for P<=8.
            vmem_limit_bytes=32 * 1024 * 1024),
    )(x_blocks, *[wp[k] for k in weight_keys])
    return out.reshape(n_blocks * P, 128)


# ------------------------------ Glue (plain JAX) --------------------------------

def prepare_sequences(H_map, T, walks, src, dst):
    # TODO(synk): torch's per-row Tensor.apply_ over a Python dict H[s].get(x, -1)
    # has no Pallas equivalent; it is modeled by a dense int32 table H_map here.
    num_T = T.shape[0]
    batch = jnp.concatenate([src, dst])               # (2n,)
    batch_size = batch.shape[0]
    w = walks[batch]                                  # (2n, nw, L) node ids
    src_rep = jnp.concatenate([src, src])             # src.repeat(2)
    dst_rep = jnp.concatenate([dst, dst])             # dst.repeat(2)
    u_idx = H_map[src_rep[:, None, None], w]          # (2n, nw, L)
    v_idx = H_map[dst_rep[:, None, None], w]
    u_idx = jnp.where(u_idx < 0, u_idx + num_T, u_idx)  # torch T[-1] => last row of T
    v_idx = jnp.where(v_idx < 0, v_idx + num_T, v_idx)
    u = T[u_idx]                                      # (2n, nw, L, wl)
    v = T[v_idx]
    x = jnp.concatenate([u, v], axis=-1)              # (2n, nw, L, 2*wl)
    return x, batch_size, x.shape[1], x.shape[2]


def prepare_weights(params):
    # Matmul weights cast to bf16 once (explicit MXU precision); biases & LSTM state stay f32.
    bf16 = jnp.bfloat16
    return dict(
        w1=params["w1"].astype(bf16), b1=params["b1"],
        w2=params["w2"].astype(bf16), b2=params["b2"],
        wih0=params["wih0"].astype(bf16), whh0=params["whh0"].astype(bf16), bl0=params["bl0"],
        wih1=params["wih1"].astype(bf16), whh1=params["whh1"].astype(bf16), bl1=params["bl1"],
        w3=params["w3"].astype(bf16), b3=params["b3"],
        w4=jnp.pad(params["w4"], ((0, 0), (0, 127))).astype(bf16),   # (E,1) -> (E,128)
        b4=jnp.pad(params["b4"], ((0, 0), (0, 127))),                # (1,1) -> (1,128)
    )


def surel_forward(params, H_map, T, walks, src, dst, pair_block=8):
    x, batch_size, nw, L = prepare_sequences(H_map, T, walks, src, dst)
    n = batch_size // 2
    Np = 2 * nw
    dwl = x.shape[-1]

    # Pair block size: as large as possible (P a multiple of 8 makes the output store
    # sublane-dense) while keeping >= 2 grid steps so both v7x TensorCores get work.
    P = max(1, min(pair_block, n // 2))
    n_blocks = -(-n // P)
    n_pad = n_blocks * P

    # Regroup so each block is time-major over P pairs:
    #   flat row inside a block = t*(P*Np) + p*Np + (sd*nw + walk)
    xr = x.reshape(2, n, nw, L, dwl)                  # (src/dst, pair, walk, t, feat)
    xr = jnp.transpose(xr, (1, 3, 0, 2, 4))           # (pair, t, src/dst, walk, feat)
    xr = xr.reshape(n, L, Np, dwl)
    xr = jnp.pad(xr, ((0, n_pad - n), (0, 0), (0, 0), (0, 0)))
    xr = xr.reshape(n_blocks, P, L, Np, dwl)
    xr = jnp.transpose(xr, (0, 2, 1, 3, 4))           # (block, t, pair-in-block, walkrow, feat)
    xr = xr.reshape(n_blocks, L * P * Np, dwl).astype(jnp.bfloat16)

    wp = prepare_weights(params)
    out = surel_fused_forward(xr, wp, P=P, Np=Np, L=L, Din=dwl)
    return out[:n, :1]                                # (n_pairs, 1), logit in column 0


# --------------------------- Pure-JAX reference ----------------------------

def surel_reference(params, H_map, T, walks, src, dst):
    hp = lax.Precision.HIGHEST
    x, batch_size, nw, L = prepare_sequences(H_map, T, walks, src, dst)
    wl2 = x.shape[-1]
    x = x.reshape(batch_size * nw, L, wl2)
    x = jnp.transpose(x, (1, 0, 2))                   # (L, 2n*nw, 2*wl) seq-major like nn.LSTM
    h = jnp.maximum(jnp.dot(x, params["w1"], precision=hp) + params["b1"], 0.0)
    h = jnp.maximum(jnp.dot(h, params["w2"], precision=hp) + params["b2"], 0.0)
    E = h.shape[-1]
    N = h.shape[1]

    def cell(x_in, hh, cc, wih, whh, b):
        gates = (jnp.dot(x_in, wih, precision=hp)
                 + jnp.dot(hh, whh, precision=hp) + b)
        i = jax.nn.sigmoid(gates[:, 0 * E:1 * E])
        f = jax.nn.sigmoid(gates[:, 1 * E:2 * E])
        g = jnp.tanh(gates[:, 2 * E:3 * E])
        o = jax.nn.sigmoid(gates[:, 3 * E:4 * E])
        c_new = f * cc + i * g
        return o * jnp.tanh(c_new), c_new

    def step(carry, x_t):
        h0, c0, h1, c1 = carry
        h0, c0 = cell(x_t, h0, c0, params["wih0"], params["whh0"], params["bl0"])
        h1, c1 = cell(h0, h1, c1, params["wih1"], params["whh1"], params["bl1"])
        return (h0, c0, h1, c1), None

    zeros = jnp.zeros((N, E), jnp.float32)
    (h0, c0, h1, c1), _ = lax.scan(step, (zeros, zeros, zeros, zeros), h)
    z = h1.reshape(batch_size, nw, E).mean(axis=1)
    n = batch_size // 2
    z = (z[:n] + z[n:]) * 0.5
    hh = jnp.maximum(jnp.dot(z, params["w3"], precision=hp) + params["b3"], 0.0)
    return jnp.dot(hh, params["w4"], precision=hp) + params["b4"]


# ------------------------------- Parameters --------------------------------

def init_params(key, wl, emb):
    ks = jax.random.split(key, 20)

    def lin(k, din, dout):
        s = 1.0 / jnp.sqrt(float(din))
        return jax.random.uniform(k, (din, dout), jnp.float32, -s, s)

    def bias(k, d, fan_in):
        s = 1.0 / jnp.sqrt(float(fan_in))
        return jax.random.uniform(k, (1, d), jnp.float32, -s, s)

    return dict(
        # embedder MLP
        w1=lin(ks[0], 2 * wl, 2 * emb), b1=bias(ks[1], 2 * emb, 2 * wl),
        w2=lin(ks[2], 2 * emb, emb),    b2=bias(ks[3], emb, 2 * emb),
        # 2-layer LSTM (gate order i,f,g,o; combined b_ih+b_hh)
        wih0=lin(ks[4], emb, 4 * emb), whh0=lin(ks[5], emb, 4 * emb), bl0=bias(ks[6], 4 * emb, emb),
        wih1=lin(ks[7], emb, 4 * emb), whh1=lin(ks[8], emb, 4 * emb), bl1=bias(ks[9], 4 * emb, emb),
        # lp head
        w3=lin(ks[10], emb, emb), b3=bias(ks[11], emb, emb),
        w4=lin(ks[12], emb, 1),   b4=bias(ks[13], 1, emb),
    )


if __name__ == "__main__":
    key = jax.random.PRNGKey(0)
    wl = 4          # walk length == per-entry feature width of T
    emb = 32        # embedding_size
    num_nodes = 10
    num_T = 16
    nw = 8          # walks per node
    n_pairs = 2     # len(src) == len(dst)

    k = jax.random.split(key, 8)
    params = init_params(k[0], wl, emb)
    T = jax.random.normal(k[1], (num_T, wl), jnp.float32)
    walks = jax.random.randint(k[2], (num_nodes, nw, wl), 0, num_nodes, dtype=jnp.int32)
    H_map = jax.random.randint(k[3], (num_nodes, num_nodes), -1, num_T, dtype=jnp.int32)
    src = jnp.array([0, 3], dtype=jnp.int32)
    dst = jnp.array([5, 7], dtype=jnp.int32)

    out = jax.jit(surel_forward)(params, H_map, T, walks, src, dst)
    out = jax.block_until_ready(out)
    ref = surel_reference(params, H_map, T, walks, src, dst)

    assert out.shape == (n_pairs, 1), out.shape
    assert jnp.allclose(out, ref, atol=2e-2, rtol=2e-2), (out, ref)
    print("KERNEL_OK")
</pallas_src>

<mosaic_0001>
module attributes {stable_mosaic.version = 11 : i64} {
  func.func @_surel_fused_kernel(%arg0: i32, %arg1: memref<1x64x8xbf16, #tpu.memory_space<vmem>>, %arg2: memref<8x64xbf16, #tpu.memory_space<vmem>>, %arg3: memref<1x64xf32, #tpu.memory_space<vmem>>, %arg4: memref<64x32xbf16, #tpu.memory_space<vmem>>, %arg5: memref<1x32xf32, #tpu.memory_space<vmem>>, %arg6: memref<32x128xbf16, #tpu.memory_space<vmem>>, %arg7: memref<32x128xbf16, #tpu.memory_space<vmem>>, %arg8: memref<1x128xf32, #tpu.memory_space<vmem>>, %arg9: memref<32x128xbf16, #tpu.memory_space<vmem>>, %arg10: memref<32x128xbf16, #tpu.memory_space<vmem>>, %arg11: memref<1x128xf32, #tpu.memory_space<vmem>>, %arg12: memref<32x32xbf16, #tpu.memory_space<vmem>>, %arg13: memref<1x32xf32, #tpu.memory_space<vmem>>, %arg14: memref<32x128xbf16, #tpu.memory_space<vmem>>, %arg15: memref<1x128xf32, #tpu.memory_space<vmem>>, %arg16: memref<1x1x128xf32, #tpu.memory_space<vmem>>, %arg17: memref<4x16x128xf32, #tpu.memory_space<vmem>>) attributes {dimension_semantics = [#tpu.dimension_semantics<parallel>], iteration_bounds = array<i64: 2>, scalar_prefetch = 0 : i64, scratch_operands = 1 : i64, tpu.core_type = #tpu.core_type<tc>, window_params = [{transform_indices = @transform_0, window_bounds = array<i64: 1, 64, 8>}, {pipeline_mode = #tpu.pipeline_mode<synchronous>, transform_indices = @transform_1, window_bounds = array<i64: 8, 64>}, {pipeline_mode = #tpu.pipeline_mode<synchronous>, transform_indices = @transform_2, window_bounds = array<i64: 1, 64>}, {pipeline_mode = #tpu.pipeline_mode<synchronous>, transform_indices = @transform_3, window_bounds = array<i64: 64, 32>}, {pipeline_mode = #tpu.pipeline_mode<synchronous>, transform_indices = @transform_4, window_bounds = array<i64: 1, 32>}, {pipeline_mode = #tpu.pipeline_mode<synchronous>, transform_indices = @transform_5, window_bounds = array<i64: 32, 128>}, {pipeline_mode = #tpu.pipeline_mode<synchronous>, transform_indices = @transform_6, window_bounds = array<i64: 32, 128>}, {pipeline_mode = #tpu.pipeline_mode<synchronous>, transform_indices = @transform_7, window_bounds = array<i64: 1, 128>}, {pipeline_mode = #tpu.pipeline_mode<synchronous>, transform_indices = @transform_8, window_bounds = array<i64: 32, 128>}, {pipeline_mode = #tpu.pipeline_mode<synchronous>, transform_indices = @transform_9, window_bounds = array<i64: 32, 128>}, {pipeline_mode = #tpu.pipeline_mode<synchronous>, transform_indices = @transform_10, window_bounds = array<i64: 1, 128>}, {pipeline_mode = #tpu.pipeline_mode<synchronous>, transform_indices = @transform_11, window_bounds = array<i64: 32, 32>}, {pipeline_mode = #tpu.pipeline_mode<synchronous>, transform_indices = @transform_12, window_bounds = array<i64: 1, 32>}, {pipeline_mode = #tpu.pipeline_mode<synchronous>, transform_indices = @transform_13, window_bounds = array<i64: 32, 128>}, {pipeline_mode = #tpu.pipeline_mode<synchronous>, transform_indices = @transform_14, window_bounds = array<i64: 1, 128>}, {transform_indices = @transform_15, window_bounds = array<i64: 1, 1, 128>}]} {
    %c0 = arith.constant 0 : index
    %c0_0 = arith.constant 0 : index
    %c0_1 = arith.constant 0 : index
    %0 = vector.load %arg1[%c0, %c0_0, %c0_1] : memref<1x64x8xbf16, #tpu.memory_space<vmem>>, vector<1x64x8xbf16>
    %1 = vector.shape_cast %0 : vector<1x64x8xbf16> to vector<64x8xbf16>
    %c0_2 = arith.constant 0 : index
    %c0_3 = arith.constant 0 : index
    %2 = vector.load %arg2[%c0_2, %c0_3] : memref<8x64xbf16, #tpu.memory_space<vmem>>, vector<8x64xbf16>
    %cst = arith.constant dense<0.000000e+00> : vector<64x64xf32>
    %3 = tpu.matmul %1, %2, %cst {dimension_numbers = #tpu.dot_dimension_numbers<[1], [0], [0], [1], [0, 0, 1, 1], [], []>} : vector<64x8xbf16>, vector<8x64xbf16>, vector<64x64xf32> -> vector<64x64xf32>
    %c0_4 = arith.constant 0 : index
    %c0_5 = arith.constant 0 : index
    %4 = vector.load %arg3[%c0_4, %c0_5] : memref<1x64xf32, #tpu.memory_space<vmem>>, vector<1x64xf32>
    %5 = vector.broadcast %4 : vector<1x64xf32> to vector<64x64xf32>
    %6 = arith.addf %3, %5 : vector<64x64xf32>
    %cst_6 = arith.constant 0.000000e+00 : f32
    %7 = vector.broadcast %cst_6 : f32 to vector<64x64xf32>
    %8 = arith.maximumf %6, %7 : vector<64x64xf32>
    %9 = arith.truncf %8 : vector<64x64xf32> to vector<64x64xbf16>
    %c0_7 = arith.constant 0 : index
    %c0_8 = arith.constant 0 : index
    %10 = vector.load %arg4[%c0_7, %c0_8] : memref<64x32xbf16, #tpu.memory_space<vmem>>, vector<64x32xbf16>
    %cst_9 = arith.constant dense<0.000000e+00> : vector<64x32xf32>
    %11 = tpu.matmul %9, %10, %cst_9 {dimension_numbers = #tpu.dot_dimension_numbers<[1], [0], [0], [1], [0, 0, 1, 1], [], []>} : vector<64x64xbf16>, vector<64x32xbf16>, vector<64x32xf32> -> vector<64x32xf32>
    %c0_10 = arith.constant 0 : index
    %c0_11 = arith.constant 0 : index
    %12 = vector.load %arg5[%c0_10, %c0_11] : memref<1x32xf32, #tpu.memory_space<vmem>>, vector<1x32xf32>
    %13 = vector.broadcast %12 : vector<1x32xf32> to vector<64x32xf32>
    %14 = arith.addf %11, %13 : vector<64x32xf32>
    %cst_12 = arith.constant 0.000000e+00 : f32
    %15 = vector.broadcast %cst_12 : f32 to vector<64x32xf32>
    %16 = arith.maximumf %14, %15 : vector<64x32xf32>
    %17 = arith.truncf %16 : vector<64x32xf32> to vector<64x32xbf16>
    %c0_13 = arith.constant 0 : index
    %c0_14 = arith.constant 0 : index
    %18 = vector.load %arg6[%c0_13, %c0_14] : memref<32x128xbf16, #tpu.memory_space<vmem>>, vector<32x128xbf16>
    %cst_15 = arith.constant dense<0.000000e+00> : vector<64x128xf32>
    %19 = tpu.matmul %17, %18, %cst_15 {dimension_numbers = #tpu.dot_dimension_numbers<[1], [0], [0], [1], [0, 0, 1, 1], [], []>} : vector<64x32xbf16>, vector<32x128xbf16>, vector<64x128xf32> -> vector<64x128xf32>
    %c0_16 = arith.constant 0 : index
    %c0_17 = arith.constant 0 : index
    %20 = vector.load %arg8[%c0_16, %c0_17] : memref<1x128xf32, #tpu.memory_space<vmem>>, vector<1x128xf32>
    %21 = vector.broadcast %20 : vector<1x128xf32> to vector<64x128xf32>
    %22 = arith.addf %19, %21 : vector<64x128xf32>
    %23 = vector.shape_cast %22 : vector<64x128xf32> to vector<4x16x128xf32>
    %c0_18 = arith.constant 0 : index
    %c0_19 = arith.constant 0 : index
    %c0_20 = arith.constant 0 : index
    %24 = vector.load %arg17[%c0_18, %c0_19, %c0_20] : memref<4x16x128xf32, #tpu.memory_space<vmem>>, vector<4x16x128xf32>
    tpu.vector_store %arg17[%c0_18, %c0_19, %c0_20], %23 {strides = array<i32>} : memref<4x16x128xf32, #tpu.memory_space<vmem>>, vector<4x16x128xf32>,
    %cst_21 = arith.constant 0.000000e+00 : f32
    %25 = vector.broadcast %cst_21 : f32 to vector<16x32xf32>
    %c0_i32 = arith.constant 0 : i32
    %26 = arith.index_cast %c0_i32 : i32 to index
    %c0_22 = arith.constant 0 : index
    %c0_23 = arith.constant 0 : index
    %27 = vector.load %arg17[%26, %c0_22, %c0_23] : memref<4x16x128xf32, #tpu.memory_space<vmem>>, vector<1x16x128xf32>
    %28 = vector.shape_cast %27 : vector<1x16x128xf32> to vector<16x128xf32>
    %29 = arith.truncf %25 : vector<16x32xf32> to vector<16x32xbf16>
    %c0_24 = arith.constant 0 : index
    %c0_25 = arith.constant 0 : index
    %30 = vector.load %arg7[%c0_24, %c0_25] : memref<32x128xbf16, #tpu.memory_space<vmem>>, vector<32x128xbf16>
    %cst_26 = arith.constant dense<0.000000e+00> : vector<16x128xf32>
    %31 = tpu.matmul %29, %30, %cst_26 {dimension_numbers = #tpu.dot_dimension_numbers<[1], [0], [0], [1], [0, 0, 1, 1], [], []>} : vector<16x32xbf16>, vector<32x128xbf16>, vector<16x128xf32> -> vector<16x128xf32>
    %32 = arith.addf %28, %31 : vector<16x128xf32>
    %33 = vector.extract_strided_slice %32 {offsets = [0, 0], sizes = [16, 32], strides = [1, 1]} : vector<16x128xf32> to vector<16x32xf32>
    %34 = arith.negf %33 : vector<16x32xf32>
    %35 = math.exp %34 : vector<16x32xf32>
    %cst_27 = arith.constant 1.000000e+00 : f32
    %36 = vector.broadcast %cst_27 : f32 to vector<16x32xf32>
    %37 = arith.addf %36, %35 : vector<16x32xf32>
    %38 = arith.divf %36, %37 : vector<16x32xf32>
    %39 = vector.extract_strided_slice %32 {offsets = [0, 32], sizes = [16, 32], strides = [1, 1]} : vector<16x128xf32> to vector<16x32xf32>
    %40 = arith.negf %39 : vector<16x32xf32>
    %41 = math.exp %40 : vector<16x32xf32>
    %cst_28 = arith.constant 1.000000e+00 : f32
    %42 = vector.broadcast %cst_28 : f32 to vector<16x32xf32>
    %43 = arith.addf %42, %41 : vector<16x32xf32>
    %44 = arith.divf %42, %43 : vector<16x32xf32>
    %45 = vector.extract_strided_slice %32 {offsets = [0, 64], sizes = [16, 32], strides = [1, 1]} : vector<16x128xf32> to vector<16x32xf32>
    %46 = math.tanh %45 : vector<16x32xf32>
    %47 = vector.extract_strided_slice %32 {offsets = [0, 96], sizes = [16, 32], strides = [1, 1]} : vector<16x128xf32> to vector<16x32xf32>
    %48 = arith.negf %47 : vector<16x32xf32>
    %49 = math.exp %48 : vector<16x32xf32>
    %cst_29 = arith.constant 1.000000e+00 : f32
    %50 = vector.broadcast %cst_29 : f32 to vector<16x32xf32>
    %51 = arith.addf %50, %49 : vector<16x32xf32>
    %52 = arith.divf %50, %51 : vector<16x32xf32>
    %53 = arith.mulf %44, %25 : vector<16x32xf32>
    %54 = arith.mulf %38, %46 : vector<16x32xf32>
    %55 = arith.addf %53, %54 : vector<16x32xf32>
    %56 = math.tanh %55 : vector<16x32xf32>
    %57 = arith.mulf %52, %56 : vector<16x32xf32>
    %58 = arith.truncf %57 : vector<16x32xf32> to vector<16x32xbf16>
    %c0_30 = arith.constant 0 : index
    %c0_31 = arith.constant 0 : index
    %59 = vector.load %arg9[%c0_30, %c0_31] : memref<32x128xbf16, #tpu.memory_space<vmem>>, vector<32x128xbf16>
    %cst_32 = arith.constant dense<0.000000e+00> : vector<16x128xf32>
    %60 = tpu.matmul %58, %59, %cst_32 {dimension_numbers = #tpu.dot_dimension_numbers<[1], [0], [0], [1], [0, 0, 1, 1], [], []>} : vector<16x32xbf16>, vector<32x128xbf16>, vector<16x128xf32> -> vector<16x128xf32>
    %61 = arith.truncf %25 : vector<16x32xf32> to vector<16x32xbf16>
    %c0_33 = arith.constant 0 : index
    %c0_34 = arith.constant 0 : index
    %62 = vector.load %arg10[%c0_33, %c0_34] : memref<32x128xbf16, #tpu.memory_space<vmem>>, vector<32x128xbf16>
    %cst_35 = arith.constant dense<0.000000e+00> : vector<16x128xf32>
    %63 = tpu.matmul %61, %62, %cst_35 {dimension_numbers = #tpu.dot_dimension_numbers<[1], [0], [0], [1], [0, 0, 1, 1], [], []>} : vector<16x32xbf16>, vector<32x128xbf16>, vector<16x128xf32> -> vector<16x128xf32>
    %64 = arith.addf %60, %63 : vector<16x128xf32>
    %c0_36 = arith.constant 0 : index
    %c0_37 = arith.constant 0 : index
    %65 = vector.load %arg11[%c0_36, %c0_37] : memref<1x128xf32, #tpu.memory_space<vmem>>, vector<1x128xf32>
    %66 = vector.broadcast %65 : vector<1x128xf32> to vector<16x128xf32>
    %67 = arith.addf %64, %66 : vector<16x128xf32>
    %68 = vector.extract_strided_slice %67 {offsets = [0, 0], sizes = [16, 32], strides = [1, 1]} : vector<16x128xf32> to vector<16x32xf32>
    %69 = arith.negf %68 : vector<16x32xf32>
    %70 = math.exp %69 : vector<16x32xf32>
    %cst_38 = arith.constant 1.000000e+00 : f32
    %71 = vector.broadcast %cst_38 : f32 to vector<16x32xf32>
    %72 = arith.addf %71, %70 : vector<16x32xf32>
    %73 = arith.divf %71, %72 : vector<16x32xf32>
    %74 = vector.extract_strided_slice %67 {offsets = [0, 32], sizes = [16, 32], strides = [1, 1]} : vector<16x128xf32> to vector<16x32xf32>
    %75 = arith.negf %74 : vector<16x32xf32>
    %76 = math.exp %75 : vector<16x32xf32>
    %cst_39 = arith.constant 1.000000e+00 : f32
    %77 = vector.broadcast %cst_39 : f32 to vector<16x32xf32>
    %78 = arith.addf %77, %76 : vector<16x32xf32>
    %79 = arith.divf %77, %78 : vector<16x32xf32>
    %80 = vector.extract_strided_slice %67 {offsets = [0, 64], sizes = [16, 32], strides = [1, 1]} : vector<16x128xf32> to vector<16x32xf32>
    %81 = math.tanh %80 : vector<16x32xf32>
    %82 = vector.extract_strided_slice %67 {offsets = [0, 96], sizes = [16, 32], strides = [1, 1]} : vector<16x128xf32> to vector<16x32xf32>
    %83 = arith.negf %82 : vector<16x32xf32>
    %84 = math.exp %83 : vector<16x32xf32>
    %cst_40 = arith.constant 1.000000e+00 : f32
    %85 = vector.broadcast %cst_40 : f32 to vector<16x32xf32>
    %86 = arith.addf %85, %84 : vector<16x32xf32>
    %87 = arith.divf %85, %86 : vector<16x32xf32>
    %88 = arith.mulf %79, %25 : vector<16x32xf32>
    %89 = arith.mulf %73, %81 : vector<16x32xf32>
    %90 = arith.addf %88, %89 : vector<16x32xf32>
    %91 = math.tanh %90 : vector<16x32xf32>
    %92 = arith.mulf %87, %91 : vector<16x32xf32>
    %c1_i32 = arith.constant 1 : i32
    %93 = arith.index_cast %c1_i32 : i32 to index
    %c0_41 = arith.constant 0 : index
    %c0_42 = arith.constant 0 : index
    %94 = vector.load %arg17[%93, %c0_41, %c0_42] : memref<4x16x128xf32, #tpu.memory_space<vmem>>, vector<1x16x128xf32>
    %95 = vector.shape_cast %94 : vector<1x16x128xf32> to vector<16x128xf32>
    %96 = arith.truncf %57 : vector<16x32xf32> to vector<16x32xbf16>
    %c0_43 = arith.constant 0 : index
    %c0_44 = arith.constant 0 : index
    %97 = vector.load %arg7[%c0_43, %c0_44] : memref<32x128xbf16, #tpu.memory_space<vmem>>, vector<32x128xbf16>
    %cst_45 = arith.constant dense<0.000000e+00> : vector<16x128xf32>
    %98 = tpu.matmul %96, %97, %cst_45 {dimension_numbers = #tpu.dot_dimension_numbers<[1], [0], [0], [1], [0, 0, 1, 1], [], []>} : vector<16x32xbf16>, vector<32x128xbf16>, vector<16x128xf32> -> vector<16x128xf32>
    %99 = arith.addf %95, %98 : vector<16x128xf32>
    %100 = vector.extract_strided_slice %99 {offsets = [0, 0], sizes = [16, 32], strides = [1, 1]} : vector<16x128xf32> to vector<16x32xf32>
    %101 = arith.negf %100 : vector<16x32xf32>
    %102 = math.exp %101 : vector<16x32xf32>
    %cst_46 = arith.constant 1.000000e+00 : f32
    %103 = vector.broadcast %cst_46 : f32 to vector<16x32xf32>
    %104 = arith.addf %103, %102 : vector<16x32xf32>
    %105 = arith.divf %103, %104 : vector<16x32xf32>
    %106 = vector.extract_strided_slice %99 {offsets = [0, 32], sizes = [16, 32], strides = [1, 1]} : vector<16x128xf32> to vector<16x32xf32>
    %107 = arith.negf %106 : vector<16x32xf32>
    %108 = math.exp %107 : vector<16x32xf32>
    %cst_47 = arith.constant 1.000000e+00 : f32
    %109 = vector.broadcast %cst_47 : f32 to vector<16x32xf32>
    %110 = arith.addf %109, %108 : vector<16x32xf32>
    %111 = arith.divf %109, %110 : vector<16x32xf32>
    %112 = vector.extract_strided_slice %99 {offsets = [0, 64], sizes = [16, 32], strides = [1, 1]} : vector<16x128xf32> to vector<16x32xf32>
    %113 = math.tanh %112 : vector<16x32xf32>
    %114 = vector.extract_strided_slice %99 {offsets = [0, 96], sizes = [16, 32], strides = [1, 1]} : vector<16x128xf32> to vector<16x32xf32>
    %115 = arith.negf %114 : vector<16x32xf32>
    %116 = math.exp %115 : vector<16x32xf32>
    %cst_48 = arith.constant 1.000000e+00 : f32
    %117 = vector.broadcast %cst_48 : f32 to vector<16x32xf32>
    %118 = arith.addf %117, %116 : vector<16x32xf32>
    %119 = arith.divf %117, %118 : vector<16x32xf32>
    %120 = arith.mulf %111, %55 : vector<16x32xf32>
    %121 = arith.mulf %105, %113 : vector<16x32xf32>
    %122 = arith.addf %120, %121 : vector<16x32xf32>
    %123 = math.tanh %122 : vector<16x32xf32>
    %124 = arith.mulf %119, %123 : vector<16x32xf32>
    %125 = arith.truncf %124 : vector<16x32xf32> to vector<16x32xbf16>
    %c0_49 = arith.constant 0 : index
    %c0_50 = arith.constant 0 : index
    %126 = vector.load %arg9[%c0_49, %c0_50] : memref<32x128xbf16, #tpu.memory_space<vmem>>, vector<32x128xbf16>
    %cst_51 = arith.constant dense<0.000000e+00> : vector<16x128xf32>
    %127 = tpu.matmul %125, %126, %cst_51 {dimension_numbers = #tpu.dot_dimension_numbers<[1], [0], [0], [1], [0, 0, 1, 1], [], []>} : vector<16x32xbf16>, vector<32x128xbf16>, vector<16x128xf32> -> vector<16x128xf32>
    %128 = arith.truncf %92 : vector<16x32xf32> to vector<16x32xbf16>
    %c0_52 = arith.constant 0 : index
    %c0_53 = arith.constant 0 : index
    %129 = vector.load %arg10[%c0_52, %c0_53] : memref<32x128xbf16, #tpu.memory_space<vmem>>, vector<32x128xbf16>
    %cst_54 = arith.constant dense<0.000000e+00> : vector<16x128xf32>
    %130 = tpu.matmul %128, %129, %cst_54 {dimension_numbers = #tpu.dot_dimension_numbers<[1], [0], [0], [1], [0, 0, 1, 1], [], []>} : vector<16x32xbf16>, vector<32x128xbf16>, vector<16x128xf32> -> vector<16x128xf32>
    %131 = arith.addf %127, %130 : vector<16x128xf32>
    %c0_55 = arith.constant 0 : index
    %c0_56 = arith.constant 0 : index
    %132 = vector.load %arg11[%c0_55, %c0_56] : memref<1x128xf32, #tpu.memory_space<vmem>>, vector<1x128xf32>
    %133 = vector.broadcast %132 : vector<1x128xf32> to vector<16x128xf32>
    %134 = arith.addf %131, %133 : vector<16x128xf32>
    %135 = vector.extract_strided_slice %134 {offsets = [0, 0], sizes = [16, 32], strides = [1, 1]} : vector<16x128xf32> to vector<16x32xf32>
    %136 = arith.negf %135 : vector<16x32xf32>
    %137 = math.exp %136 : vector<16x32xf32>
    %cst_57 = arith.constant 1.000000e+00 : f32
    %138 = vector.broadcast %cst_57 : f32 to vector<16x32xf32>
    %139 = arith.addf %138, %137 : vector<16x32xf32>
    %140 = arith.divf %138, %139 : vector<16x32xf32>
    %141 = vector.extract_strided_slice %134 {offsets = [0, 32], sizes = [16, 32], strides = [1, 1]} : vector<16x128xf32> to vector<16x32xf32>
    %142 = arith.negf %141 : vector<16x32xf32>
    %143 = math.exp %142 : vector<16x32xf32>
    %cst_58 = arith.constant 1.000000e+00 : f32
    %144 = vector.broadcast %cst_58 : f32 to vector<16x32xf32>
    %145 = arith.addf %144, %143 : vector<16x32xf32>
    %146 = arith.divf %144, %145 : vector<16x32xf32>
    %147 = vector.extract_strided_slice %134 {offsets = [0, 64], sizes = [16, 32], strides = [1, 1]} : vector<16x128xf32> to vector<16x32xf32>
    %148 = math.tanh %147 : vector<16x32xf32>
    %149 = vector.extract_strided_slice %134 {offsets = [0, 96], sizes = [16, 32], strides = [1, 1]} : vector<16x128xf32> to vector<16x32xf32>
    %150 = arith.negf %149 : vector<16x32xf32>
    %151 = math.exp %150 : vector<16x32xf32>
    %cst_59 = arith.constant 1.000000e+00 : f32
    %152 = vector.broadcast %cst_59 : f32 to vector<16x32xf32>
    %153 = arith.addf %152, %151 : vector<16x32xf32>
    %154 = arith.divf %152, %153 : vector<16x32xf32>
    %155 = arith.mulf %146, %90 : vector<16x32xf32>
    %156 = arith.mulf %140, %148 : vector<16x32xf32>
    %157 = arith.addf %155, %156 : vector<16x32xf32>
    %158 = math.tanh %157 : vector<16x32xf32>
    %159 = arith.mulf %154, %158 : vector<16x32xf32>
    %c2_i32 = arith.constant 2 : i32
    %160 = arith.index_cast %c2_i32 : i32 to index
    %c0_60 = arith.constant 0 : index
    %c0_61 = arith.constant 0 : index
    %161 = vector.load %arg17[%160, %c0_60, %c0_61] : memref<4x16x128xf32, #tpu.memory_space<vmem>>, vector<1x16x128xf32>
    %162 = vector.shape_cast %161 : vector<1x16x128xf32> to vector<16x128xf32>
    %163 = arith.truncf %124 : vector<16x32xf32> to vector<16x32xbf16>
    %c0_62 = arith.constant 0 : index
    %c0_63 = arith.constant 0 : index
    %164 = vector.load %arg7[%c0_62, %c0_63] : memref<32x128xbf16, #tpu.memory_space<vmem>>, vector<32x128xbf16>
    %cst_64 = arith.constant dense<0.000000e+00> : vector<16x128xf32>
    %165 = tpu.matmul %163, %164, %cst_64 {dimension_numbers = #tpu.dot_dimension_numbers<[1], [0], [0], [1], [0, 0, 1, 1], [], []>} : vector<16x32xbf16>, vector<32x128xbf16>, vector<16x128xf32> -> vector<16x128xf32>
    %166 = arith.addf %162, %165 : vector<16x128xf32>
    %167 = vector.extract_strided_slice %166 {offsets = [0, 0], sizes = [16, 32], strides = [1, 1]} : vector<16x128xf32> to vector<16x32xf32>
    %168 = arith.negf %167 : vector<16x32xf32>
    %169 = math.exp %168 : vector<16x32xf32>
    %cst_65 = arith.constant 1.000000e+00 : f32
    %170 = vector.broadcast %cst_65 : f32 to vector<16x32xf32>
    %171 = arith.addf %170, %169 : vector<16x32xf32>
    %172 = arith.divf %170, %171 : vector<16x32xf32>
    %173 = vector.extract_strided_slice %166 {offsets = [0, 32], sizes = [16, 32], strides = [1, 1]} : vector<16x128xf32> to vector<16x32xf32>
    %174 = arith.negf %173 : vector<16x32xf32>
    %175 = math.exp %174 : vector<16x32xf32>
    %cst_66 = arith.constant 1.000000e+00 : f32
    %176 = vector.broadcast %cst_66 : f32 to vector<16x32xf32>
    %177 = arith.addf %176, %175 : vector<16x32xf32>
    %178 = arith.divf %176, %177 : vector<16x32xf32>
    %179 = vector.extract_strided_slice %166 {offsets = [0, 64], sizes = [16, 32], strides = [1, 1]} : vector<16x128xf32> to vector<16x32xf32>
    %180 = math.tanh %179 : vector<16x32xf32>
    %181 = vector.extract_strided_slice %166 {offsets = [0, 96], sizes = [16, 32], strides = [1, 1]} : vector<16x128xf32> to vector<16x32xf32>
    %182 = arith.negf %181 : vector<16x32xf32>
    %183 = math.exp %182 : vector<16x32xf32>
    %cst_67 = arith.constant 1.000000e+00 : f32
    %184 = vector.broadcast %cst_67 : f32 to vector<16x32xf32>
    %185 = arith.addf %184, %183 : vector<16x32xf32>
    %186 = arith.divf %184, %185 : vector<16x32xf32>
    %187 = arith.mulf %178, %122 : vector<16x32xf32>
    %188 = arith.mulf %172, %180 : vector<16x32xf32>
    %189 = arith.addf %187, %188 : vector<16x32xf32>
    %190 = math.tanh %189 : vector<16x32xf32>
    %191 = arith.mulf %186, %190 : vector<16x32xf32>
    %192 = arith.truncf %191 : vector<16x32xf32> to vector<16x32xbf16>
    %c0_68 = arith.constant 0 : index
    %c0_69 = arith.constant 0 : index
    %193 = vector.load %arg9[%c0_68, %c0_69] : memref<32x128xbf16, #tpu.memory_space<vmem>>, vector<32x128xbf16>
    %cst_70 = arith.constant dense<0.000000e+00> : vector<16x128xf32>
    %194 = tpu.matmul %192, %193, %cst_70 {dimension_numbers = #tpu.dot_dimension_numbers<[1], [0], [0], [1], [0, 0, 1, 1], [], []>} : vector<16x32xbf16>, vector<32x128xbf16>, vector<16x128xf32> -> vector<16x128xf32>
    %195 = arith.truncf %159 : vector<16x32xf32> to vector<16x32xbf16>
    %c0_71 = arith.constant 0 : index
    %c0_72 = arith.constant 0 : index
    %196 = vector.load %arg10[%c0_71, %c0_72] : memref<32x128xbf16, #tpu.memory_space<vmem>>, vector<32x128xbf16>
    %cst_73 = arith.constant dense<0.000000e+00> : vector<16x128xf32>
    %197 = tpu.matmul %195, %196, %cst_73 {dimension_numbers = #tpu.dot_dimension_numbers<[1], [0], [0], [1], [0, 0, 1, 1], [], []>} : vector<16x32xbf16>, vector<32x128xbf16>, vector<16x128xf32> -> vector<16x128xf32>
    %198 = arith.addf %194, %197 : vector<16x128xf32>
    %c0_74 = arith.constant 0 : index
    %c0_75 = arith.constant 0 : index
    %199 = vector.load %arg11[%c0_74, %c0_75] : memref<1x128xf32, #tpu.memory_space<vmem>>, vector<1x128xf32>
    %200 = vector.broadcast %199 : vector<1x128xf32> to vector<16x128xf32>
    %201 = arith.addf %198, %200 : vector<16x128xf32>
    %202 = vector.extract_strided_slice %201 {offsets = [0, 0], sizes = [16, 32], strides = [1, 1]} : vector<16x128xf32> to vector<16x32xf32>
    %203 = arith.negf %202 : vector<16x32xf32>
    %204 = math.exp %203 : vector<16x32xf32>
    %cst_76 = arith.constant 1.000000e+00 : f32
    %205 = vector.broadcast %cst_76 : f32 to vector<16x32xf32>
    %206 = arith.addf %205, %204 : vector<16x32xf32>
    %207 = arith.divf %205, %206 : vector<16x32xf32>
    %208 = vector.extract_strided_slice %201 {offsets = [0, 32], sizes = [16, 32], strides = [1, 1]} : vector<16x128xf32> to vector<16x32xf32>
    %209 = arith.negf %208 : vector<16x32xf32>
    %210 = math.exp %209 : vector<16x32xf32>
    %cst_77 = arith.constant 1.000000e+00 : f32
    %211 = vector.broadcast %cst_77 : f32 to vector<16x32xf32>
    %212 = arith.addf %211, %210 : vector<16x32xf32>
    %213 = arith.divf %211, %212 : vector<16x32xf32>
    %214 = vector.extract_strided_slice %201 {offsets = [0, 64], sizes = [16, 32], strides = [1, 1]} : vector<16x128xf32> to vector<16x32xf32>
    %215 = math.tanh %214 : vector<16x32xf32>
    %216 = vector.extract_strided_slice %201 {offsets = [0, 96], sizes = [16, 32], strides = [1, 1]} : vector<16x128xf32> to vector<16x32xf32>
    %217 = arith.negf %216 : vector<16x32xf32>
    %218 = math.exp %217 : vector<16x32xf32>
    %cst_78 = arith.constant 1.000000e+00 : f32
    %219 = vector.broadcast %cst_78 : f32 to vector<16x32xf32>
    %220 = arith.addf %219, %218 : vector<16x32xf32>
    %221 = arith.divf %219, %220 : vector<16x32xf32>
    %222 = arith.mulf %213, %157 : vector<16x32xf32>
    %223 = arith.mulf %207, %215 : vector<16x32xf32>
    %224 = arith.addf %222, %223 : vector<16x32xf32>
    %225 = math.tanh %224 : vector<16x32xf32>
    %226 = arith.mulf %221, %225 : vector<16x32xf32>
    %c3_i32 = arith.constant 3 : i32
    %227 = arith.index_cast %c3_i32 : i32 to index
    %c0_79 = arith.constant 0 : index
    %c0_80 = arith.constant 0 : index
    %228 = vector.load %arg17[%227, %c0_79, %c0_80] : memref<4x16x128xf32, #tpu.memory_space<vmem>>, vector<1x16x128xf32>
    %229 = vector.shape_cast %228 : vector<1x16x128xf32> to vector<16x128xf32>
    %230 = arith.truncf %191 : vector<16x32xf32> to vector<16x32xbf16>
    %c0_81 = arith.constant 0 : index
    %c0_82 = arith.constant 0 : index
    %231 = vector.load %arg7[%c0_81, %c0_82] : memref<32x128xbf16, #tpu.memory_space<vmem>>, vector<32x128xbf16>
    %cst_83 = arith.constant dense<0.000000e+00> : vector<16x128xf32>
    %232 = tpu.matmul %230, %231, %cst_83 {dimension_numbers = #tpu.dot_dimension_numbers<[1], [0], [0], [1], [0, 0, 1, 1], [], []>} : vector<16x32xbf16>, vector<32x128xbf16>, vector<16x128xf32> -> vector<16x128xf32>
    %233 = arith.addf %229, %232 : vector<16x128xf32>
    %234 = vector.extract_strided_slice %233 {offsets = [0, 0], sizes = [16, 32], strides = [1, 1]} : vector<16x128xf32> to vector<16x32xf32>
    %235 = arith.negf %234 : vector<16x32xf32>
    %236 = math.exp %235 : vector<16x32xf32>
    %cst_84 = arith.constant 1.000000e+00 : f32
    %237 = vector.broadcast %cst_84 : f32 to vector<16x32xf32>
    %238 = arith.addf %237, %236 : vector<16x32xf32>
    %239 = arith.divf %237, %238 : vector<16x32xf32>
    %240 = vector.extract_strided_slice %233 {offsets = [0, 32], sizes = [16, 32], strides = [1, 1]} : vector<16x128xf32> to vector<16x32xf32>
    %241 = arith.negf %240 : vector<16x32xf32>
    %242 = math.exp %241 : vector<16x32xf32>
    %cst_85 = arith.constant 1.000000e+00 : f32
    %243 = vector.broadcast %cst_85 : f32 to vector<16x32xf32>
    %244 = arith.addf %243, %242 : vector<16x32xf32>
    %245 = arith.divf %243, %244 : vector<16x32xf32>
    %246 = vector.extract_strided_slice %233 {offsets = [0, 64], sizes = [16, 32], strides = [1, 1]} : vector<16x128xf32> to vector<16x32xf32>
    %247 = math.tanh %246 : vector<16x32xf32>
    %248 = vector.extract_strided_slice %233 {offsets = [0, 96], sizes = [16, 32], strides = [1, 1]} : vector<16x128xf32> to vector<16x32xf32>
    %249 = arith.negf %248 : vector<16x32xf32>
    %250 = math.exp %249 : vector<16x32xf32>
    %cst_86 = arith.constant 1.000000e+00 : f32
    %251 = vector.broadcast %cst_86 : f32 to vector<16x32xf32>
    %252 = arith.addf %251, %250 : vector<16x32xf32>
    %253 = arith.divf %251, %252 : vector<16x32xf32>
    %254 = arith.mulf %245, %189 : vector<16x32xf32>
    %255 = arith.mulf %239, %247 : vector<16x32xf32>
    %256 = arith.addf %254, %255 : vector<16x32xf32>
    %257 = math.tanh %256 : vector<16x32xf32>
    %258 = arith.mulf %253, %257 : vector<16x32xf32>
    %259 = arith.truncf %258 : vector<16x32xf32> to vector<16x32xbf16>
    %c0_87 = arith.constant 0 : index
    %c0_88 = arith.constant 0 : index
    %260 = vector.load %arg9[%c0_87, %c0_88] : memref<32x128xbf16, #tpu.memory_space<vmem>>, vector<32x128xbf16>
    %cst_89 = arith.constant dense<0.000000e+00> : vector<16x128xf32>
    %261 = tpu.matmul %259, %260, %cst_89 {dimension_numbers = #tpu.dot_dimension_numbers<[1], [0], [0], [1], [0, 0, 1, 1], [], []>} : vector<16x32xbf16>, vector<32x128xbf16>, vector<16x128xf32> -> vector<16x128xf32>
    %262 = arith.truncf %226 : vector<16x32xf32> to vector<16x32xbf16>
    %c0_90 = arith.constant 0 : index
    %c0_91 = arith.constant 0 : index
    %263 = vector.load %arg10[%c0_90, %c0_91] : memref<32x128xbf16, #tpu.memory_space<vmem>>, vector<32x128xbf16>
    %cst_92 = arith.constant dense<0.000000e+00> : vector<16x128xf32>
    %264 = tpu.matmul %262, %263, %cst_92 {dimension_numbers = #tpu.dot_dimension_numbers<[1], [0], [0], [1], [0, 0, 1, 1], [], []>} : vector<16x32xbf16>, vector<32x128xbf16>, vector<16x128xf32> -> vector<16x128xf32>
    %265 = arith.addf %261, %264 : vector<16x128xf32>
    %c0_93 = arith.constant 0 : index
    %c0_94 = arith.constant 0 : index
    %266 = vector.load %arg11[%c0_93, %c0_94] : memref<1x128xf32, #tpu.memory_space<vmem>>, vector<1x128xf32>
    %267 = vector.broadcast %266 : vector<1x128xf32> to vector<16x128xf32>
    %268 = arith.addf %265, %267 : vector<16x128xf32>
    %269 = vector.extract_strided_slice %268 {offsets = [0, 0], sizes = [16, 32], strides = [1, 1]} : vector<16x128xf32> to vector<16x32xf32>
    %270 = arith.negf %269 : vector<16x32xf32>
    %271 = math.exp %270 : vector<16x32xf32>
    %cst_95 = arith.constant 1.000000e+00 : f32
    %272 = vector.broadcast %cst_95 : f32 to vector<16x32xf32>
    %273 = arith.addf %272, %271 : vector<16x32xf32>
    %274 = arith.divf %272, %273 : vector<16x32xf32>
    %275 = vector.extract_strided_slice %268 {offsets = [0, 32], sizes = [16, 32], strides = [1, 1]} : vector<16x128xf32> to vector<16x32xf32>
    %276 = arith.negf %275 : vector<16x32xf32>
    %277 = math.exp %276 : vector<16x32xf32>
    %cst_96 = arith.constant 1.000000e+00 : f32
    %278 = vector.broadcast %cst_96 : f32 to vector<16x32xf32>
    %279 = arith.addf %278, %277 : vector<16x32xf32>
    %280 = arith.divf %278, %279 : vector<16x32xf32>
    %281 = vector.extract_strided_slice %268 {offsets = [0, 64], sizes = [16, 32], strides = [1, 1]} : vector<16x128xf32> to vector<16x32xf32>
    %282 = math.tanh %281 : vector<16x32xf32>
    %283 = vector.extract_strided_slice %268 {offsets = [0, 96], sizes = [16, 32], strides = [1, 1]} : vector<16x128xf32> to vector<16x32xf32>
    %284 = arith.negf %283 : vector<16x32xf32>
    %285 = math.exp %284 : vector<16x32xf32>
    %cst_97 = arith.constant 1.000000e+00 : f32
    %286 = vector.broadcast %cst_97 : f32 to vector<16x32xf32>
    %287 = arith.addf %286, %285 : vector<16x32xf32>
    %288 = arith.divf %286, %287 : vector<16x32xf32>
    %289 = arith.mulf %280, %224 : vector<16x32xf32>
    %290 = arith.mulf %274, %282 : vector<16x32xf32>
    %291 = arith.addf %289, %290 : vector<16x32xf32>
    %292 = math.tanh %291 : vector<16x32xf32>
    %293 = arith.mulf %288, %292 : vector<16x32xf32>
    %c4_i32 = arith.constant 4 : i32
    %294 = vector.shape_cast %293 : vector<16x32xf32> to vector<1x16x32xf32>
    %cst_98 = arith.constant dense<0.000000e+00> : vector<1x32xf32>
    %295 = vector.multi_reduction <add>, %294, %cst_98 [1] : vector<1x16x32xf32> to vector<1x32xf32>
    %cst_99 = arith.constant 1.600000e+01 : f32
    %296 = vector.broadcast %cst_99 : f32 to vector<1x32xf32>
    %297 = arith.divf %295, %296 : vector<1x32xf32>
    %298 = arith.truncf %297 : vector<1x32xf32> to vector<1x32xbf16>
    %c0_100 = arith.constant 0 : index
    %c0_101 = arith.constant 0 : index
    %299 = vector.load %arg12[%c0_100, %c0_101] : memref<32x32xbf16, #tpu.memory_space<vmem>>, vector<32x32xbf16>
    %cst_102 = arith.constant dense<0.000000e+00> : vector<1x32xf32>
    %300 = tpu.matmul %298, %299, %cst_102 {dimension_numbers = #tpu.dot_dimension_numbers<[1], [0], [0], [1], [0, 0, 1, 1], [], []>} : vector<1x32xbf16>, vector<32x32xbf16>, vector<1x32xf32> -> vector<1x32xf32>
    %c0_103 = arith.constant 0 : index
    %c0_104 = arith.constant 0 : index
    %301 = vector.load %arg13[%c0_103, %c0_104] : memref<1x32xf32, #tpu.memory_space<vmem>>, vector<1x32xf32>
    %302 = arith.addf %300, %301 : vector<1x32xf32>
    %cst_105 = arith.constant 0.000000e+00 : f32
    %303 = vector.broadcast %cst_105 : f32 to vector<1x32xf32>
    %304 = arith.maximumf %302, %303 : vector<1x32xf32>
    %305 = arith.truncf %304 : vector<1x32xf32> to vector<1x32xbf16>
    %c0_106 = arith.constant 0 : index
    %c0_107 = arith.constant 0 : index
    %306 = vector.load %arg14[%c0_106, %c0_107] : memref<32x128xbf16, #tpu.memory_space<vmem>>, vector<32x128xbf16>
    %cst_108 = arith.constant dense<0.000000e+00> : vector<1x128xf32>
    %307 = tpu.matmul %305, %306, %cst_108 {dimension_numbers = #tpu.dot_dimension_numbers<[1], [0], [0], [1], [0, 0, 1, 1], [], []>} : vector<1x32xbf16>, vector<32x128xbf16>, vector<1x128xf32> -> vector<1x128xf32>
    %c0_109 = arith.constant 0 : index
    %c0_110 = arith.constant 0 : index
    %308 = vector.load %arg15[%c0_109, %c0_110] : memref<1x128xf32, #tpu.memory_space<vmem>>, vector<1x128xf32>
    %309 = arith.addf %307, %308 : vector<1x128xf32>
    %c0_111 = arith.constant 0 : index
    %c0_112 = arith.constant 0 : index
    %c0_113 = arith.constant 0 : index
    %310 = vector.load %arg16[%c0_111, %c0_112, %c0_113] : memref<1x1x128xf32, #tpu.memory_space<vmem>>, vector<1x1x128xf32>
    %311 = vector.shape_cast %310 : vector<1x1x128xf32> to vector<1x128xf32>
    %312 = vector.shape_cast %309 : vector<1x128xf32> to vector<1x1x128xf32>
    tpu.vector_store %arg16[%c0_111, %c0_112, %c0_113], %312 {strides = array<i32>} : memref<1x1x128xf32, #tpu.memory_space<vmem>>, vector<1x1x128xf32>,
    return
  }
  func.func @transform_0(%arg0: i32) -> (i32, i32, i32) {
    %c0_i32 = arith.constant 0 : i32
    %c0_i32_0 = arith.constant 0 : i32
    %c0_i32_1 = arith.constant 0 : i32
    return %arg0, %c0_i32, %c0_i32_0 : i32, i32, i32
  }
  func.func @transform_1(%arg0: i32) -> (i32, i32) {
    %c0_i32 = arith.constant 0 : i32
    %c0_i32_0 = arith.constant 0 : i32
    %c0_i32_1 = arith.constant 0 : i32
    return %c0_i32, %c0_i32_0 : i32, i32
  }
  func.func @transform_2(%arg0: i32) -> (i32, i32) {
    %c0_i32 = arith.constant 0 : i32
    %c0_i32_0 = arith.constant 0 : i32
    %c0_i32_1 = arith.constant 0 : i32
    return %c0_i32, %c0_i32_0 : i32, i32
  }
  func.func @transform_3(%arg0: i32) -> (i32, i32) {
    %c0_i32 = arith.constant 0 : i32
    %c0_i32_0 = arith.constant 0 : i32
    %c0_i32_1 = arith.constant 0 : i32
    return %c0_i32, %c0_i32_0 : i32, i32
  }
  func.func @transform_4(%arg0: i32) -> (i32, i32) {
    %c0_i32 = arith.constant 0 : i32
    %c0_i32_0 = arith.constant 0 : i32
    %c0_i32_1 = arith.constant 0 : i32
    return %c0_i32, %c0_i32_0 : i32, i32
  }
  func.func @transform_5(%arg0: i32) -> (i32, i32) {
    %c0_i32 = arith.constant 0 : i32
    %c0_i32_0 = arith.constant 0 : i32
    %c0_i32_1 = arith.constant 0 : i32
    return %c0_i32, %c0_i32_0 : i32, i32
  }
  func.func @transform_6(%arg0: i32) -> (i32, i32) {
    %c0_i32 = arith.constant 0 : i32
    %c0_i32_0 = arith.constant 0 : i32
    %c0_i32_1 = arith.constant 0 : i32
    return %c0_i32, %c0_i32_0 : i32, i32
  }
  func.func @transform_7(%arg0: i32) -> (i32, i32) {
    %c0_i32 = arith.constant 0 : i32
    %c0_i32_0 = arith.constant 0 : i32
    %c0_i32_1 = arith.constant 0 : i32
    return %c0_i32, %c0_i32_0 : i32, i32
  }
  func.func @transform_8(%arg0: i32) -> (i32, i32) {
    %c0_i32 = arith.constant 0 : i32
    %c0_i32_0 = arith.constant 0 : i32
    %c0_i32_1 = arith.constant 0 : i32
    return %c0_i32, %c0_i32_0 : i32, i32
  }
  func.func @transform_9(%arg0: i32) -> (i32, i32) {
    %c0_i32 = arith.constant 0 : i32
    %c0_i32_0 = arith.constant 0 : i32
    %c0_i32_1 = arith.constant 0 : i32
    return %c0_i32, %c0_i32_0 : i32, i32
  }
  func.func @transform_10(%arg0: i32) -> (i32, i32) {
    %c0_i32 = arith.constant 0 : i32
    %c0_i32_0 = arith.constant 0 : i32
    %c0_i32_1 = arith.constant 0 : i32
    return %c0_i32, %c0_i32_0 : i32, i32
  }
  func.func @transform_11(%arg0: i32) -> (i32, i32) {
    %c0_i32 = arith.constant 0 : i32
    %c0_i32_0 = arith.constant 0 : i32
    %c0_i32_1 = arith.constant 0 : i32
    return %c0_i32, %c0_i32_0 : i32, i32
  }
  func.func @transform_12(%arg0: i32) -> (i32, i32) {
    %c0_i32 = arith.constant 0 : i32
    %c0_i32_0 = arith.constant 0 : i32
    %c0_i32_1 = arith.constant 0 : i32
    return %c0_i32, %c0_i32_0 : i32, i32
  }
  func.func @transform_13(%arg0: i32) -> (i32, i32) {
    %c0_i32 = arith.constant 0 : i32
    %c0_i32_0 = arith.constant 0 : i32
    %c0_i32_1 = arith.constant 0 : i32
    return %c0_i32, %c0_i32_0 : i32, i32
  }
  func.func @transform_14(%arg0: i32) -> (i32, i32) {
    %c0_i32 = arith.constant 0 : i32
    %c0_i32_0 = arith.constant 0 : i32
    %c0_i32_1 = arith.constant 0 : i32
    return %c0_i32, %c0_i32_0 : i32, i32
  }
  func.func @transform_15(%arg0: i32) -> (i32, i32, i32) {
    %c0_i32 = arith.constant 0 : i32
    %c0_i32_0 = arith.constant 0 : i32
    %c0_i32_1 = arith.constant 0 : i32
    return %arg0, %c0_i32, %c0_i32_0 : i32, i32, i32
  }
}

</mosaic_0001>

<llo_original>
// kernel: surel_forward.1
$region0: #{surel_forward.1}
  #allocation0 [shape = 'u32[]', space=smem, size = 0x4, offset = 0x4, fixed_abs, tag = 'smem constant byte address 0x4 - core index']
  #allocation1 [shape = 'u32[72,128]{1,0:T(1,128)}', space=vmem, size = 0x9000, scoped, tag = 'internal scratch']
  #allocation2 [shape = 'f32[4,16,128]{2,1,0:T(8,128)}', space=vmem, size = 0x8000, scoped, tag = 'scratch operand']
  %s0 = inlined_call_operand.vmem [shape: bf16[2,64,8], index: 0, kind: input, shape index: {}]
  %s1 = inlined_call_operand.vmem [shape: bf16[8,64], index: 1, kind: input, shape index: {}]
  %s2 = inlined_call_operand.vmem [shape: f32[1,64], index: 2, kind: input, shape index: {}]
  %s3 = inlined_call_operand.vmem [shape: bf16[64,32], index: 3, kind: input, shape index: {}]
  %s4 = inlined_call_operand.vmem [shape: f32[1,32], index: 4, kind: input, shape index: {}]
  %s5 = inlined_call_operand.vmem [shape: bf16[32,128], index: 5, kind: input, shape index: {}]
  %s6 = inlined_call_operand.vmem [shape: bf16[32,128], index: 6, kind: input, shape index: {}]
  %s7 = inlined_call_operand.vmem [shape: f32[1,128], index: 7, kind: input, shape index: {}]
  %s8 = inlined_call_operand.vmem [shape: bf16[32,128], index: 8, kind: input, shape index: {}]
  %s9 = inlined_call_operand.vmem [shape: bf16[32,128], index: 9, kind: input, shape index: {}]
  %s10 = inlined_call_operand.vmem [shape: f32[1,128], index: 10, kind: input, shape index: {}]
  %s11 = inlined_call_operand.vmem [shape: bf16[32,32], index: 11, kind: input, shape index: {}]
  %s12 = inlined_call_operand.vmem [shape: f32[1,32], index: 12, kind: input, shape index: {}]
  %s13 = inlined_call_operand.vmem [shape: bf16[32,128], index: 13, kind: input, shape index: {}]
  %s14 = inlined_call_operand.vmem [shape: f32[1,128], index: 14, kind: input, shape index: {}]
  %s15 = inlined_call_operand.vmem [shape: f32[2,1,128], index: 15, kind: output, shape index: {}]
  %s16 = sld [smem:[#allocation0]]
  $region93: #{surel_forward.1} parent=0
    _
  %s18 = ssub.s32 1, %s16
  %s19 = scalar_select 0, %s18, %s16
  loop: start=0, step=1, limit=4
  $region2: #{surel_forward.1} parent=0 // loop_pre_header
    _
  $region3: #{surel_forward.1} parent=0 // loop_header
    %s21 = sphi 0, %s25
    %p22 = scmp.ge.s32.totalorder %s21, 4
    %s31 = sphi 0, %s33
    %s34 = sphi 0, %s31
    %s35 = sphi 0, %s34
    %s51 = sphi 0, %s35
    %s55 = sphi 0, %s55
    %s57 = sphi 0, %s55
    %s58 = sphi 0, %s57
    %s72 = sphi 0, %s58
    %s76 = sphi 0, %s76
    %s78 = sphi 0, %s76
    %s79 = sphi 0, %s78
    %s93 = sphi 0, %s79
    %s97 = sphi 0, %s97
    %s99 = sphi 0, %s97
    %s100 = sphi 0, %s99
    %s114 = sphi 0, %s100
    %s118 = sphi 0, %s118
    %s120 = sphi 0, %s118
    %s121 = sphi 0, %s120
    %s135 = sphi 0, %s121
    %s139 = sphi 0, %s139
    %s141 = sphi 0, %s139
    %s142 = sphi 0, %s141
    %s156 = sphi 0, %s142
    %s160 = sphi 0, %s160
    %s162 = sphi 0, %s160
    %s163 = sphi 0, %s162
    %s177 = sphi 0, %s163
    %s181 = sphi 0, %s181
    %s183 = sphi 0, %s181
    %s184 = sphi 0, %s183
    %s198 = sphi 0, %s184
    %s202 = sphi 0, %s202
    %s204 = sphi 0, %s202
    %s205 = sphi 0, %s204
    %s219 = sphi 0, %s205
    %s223 = sphi 0, %s223
    %s225 = sphi 0, %s223
    %s226 = sphi 0, %s225
    %s240 = sphi 0, %s226
    %s244 = sphi 0, %s244
    %s246 = sphi 0, %s244
    %s247 = sphi 0, %s246
    %s261 = sphi 0, %s247
    %s265 = sphi 0, %s265
    %s267 = sphi 0, %s265
    %s268 = sphi 0, %s267
    %s282 = sphi 0, %s268
    %s286 = sphi 0, %s286
    %s288 = sphi 0, %s286
    %s289 = sphi 0, %s288
    %s303 = sphi 0, %s289
    %s307 = sphi 0, %s307
    %s309 = sphi 0, %s307
    %s310 = sphi 0, %s309
    %s324 = sphi 0, %s310
    %s328 = sphi 0, %s328
    %s330 = sphi 0, %s328
    %s331 = sphi 0, %s330
    %s345 = sphi 0, %s331
    %s351 = sphi 0, %s353
    %s354 = sphi 0, %s351
    %s355 = sphi 0, %s354
    %s371 = sphi 0, %s355
  $region4: #{surel_forward.1} parent=0 // loop_header_branch
    %24 = sbr.rel (%p22) target = $region8
  $region5: #{surel_forward.1} parent=0 // loop_body
    %s26 = ssub.s32 %s21, 1
    %s27 = ssub.s32 %s21, 2
    %s28 = sadd.s32 %s21, 1
    %s29 = ssub.s32 %s21, %s28
    %p30 = scmp.eq.s32.totalorder %s29, 0
    %s32 = sadd.s32 %s31, 1
    %s33 = scalar_select %p30, %s31, %s32
    %p36 = pneg %p30
    %p37 = scmp.eq.s32.totalorder %s21, 1
    %p38 = por %p36, %p37
    %p39 = scmp.ne.s32.totalorder %s31, %s34
    %p40 = scmp.eq.s32.totalorder %s21, 0
    %p41 = por %p39, %p40
    %p42 = scmp.ne.s32.totalorder %s31, %s34
    %p43 = scmp.eq.s32.totalorder %s26, 1
    %p44 = por %p42, %p43
    %p45 = scmp.ne.s32.totalorder %s34, %s35
    %p46 = scmp.eq.s32.totalorder %s26, 0
    %p47 = por %p45, %p46
    %p48 = scmp.ne.s32.totalorder %s34, %s35
    %p49 = scmp.eq.s32.totalorder %s27, 1
    %p50 = por %p48, %p49
    %p52 = scmp.ne.s32.totalorder %s35, %s51
    %p53 = scmp.eq.s32.totalorder %s27, 0
    %p54 = por %p52, %p53
    %s56 = sadd.s32 %s55, 1
    %p59 = scmp.eq.s32.totalorder %s21, 1
    %p60 = scmp.ne.s32.totalorder %s55, %s57
    %p61 = scmp.eq.s32.totalorder %s21, 0
    %p62 = por %p60, %p61
    %p63 = scmp.ne.s32.totalorder %s55, %s57
    %p64 = scmp.eq.s32.totalorder %s26, 1
    %p65 = por %p63, %p64
    %p66 = scmp.ne.s32.totalorder %s57, %s58
    %p67 = scmp.eq.s32.totalorder %s26, 0
    %p68 = por %p66, %p67
    %p69 = scmp.ne.s32.totalorder %s57, %s58
    %p70 = scmp.eq.s32.totalorder %s27, 1
    %p71 = por %p69, %p70
    %p73 = scmp.ne.s32.totalorder %s58, %s72
    %p74 = scmp.eq.s32.totalorder %s27, 0
    %p75 = por %p73, %p74
    %s77 = sadd.s32 %s76, 1
    %p80 = scmp.eq.s32.totalorder %s21, 1
    %p81 = scmp.ne.s32.totalorder %s76, %s78
    %p82 = scmp.eq.s32.totalorder %s21, 0
    %p83 = por %p81, %p82
    %p84 = scmp.ne.s32.totalorder %s76, %s78
    %p85 = scmp.eq.s32.totalorder %s26, 1
    %p86 = por %p84, %p85
    %p87 = scmp.ne.s32.totalorder %s78, %s79
    %p88 = scmp.eq.s32.totalorder %s26, 0
    %p89 = por %p87, %p88
    %p90 = scmp.ne.s32.totalorder %s78, %s79
    %p91 = scmp.eq.s32.totalorder %s27, 1
    %p92 = por %p90, %p91
    %p94 = scmp.ne.s32.totalorder %s79, %s93
    %p95 = scmp.eq.s32.totalorder %s27, 0
    %p96 = por %p94, %p95
    %s98 = sadd.s32 %s97, 1
    %p101 = scmp.eq.s32.totalorder %s21, 1
    %p102 = scmp.ne.s32.totalorder %s97, %s99
    %p103 = scmp.eq.s32.totalorder %s21, 0
    %p104 = por %p102, %p103
    %p105 = scmp.ne.s32.totalorder %s97, %s99
    %p106 = scmp.eq.s32.totalorder %s26, 1
    %p107 = por %p105, %p106
    %p108 = scmp.ne.s32.totalorder %s99, %s100
    %p109 = scmp.eq.s32.totalorder %s26, 0
    %p110 = por %p108, %p109
    %p111 = scmp.ne.s32.totalorder %s99, %s100
    %p112 = scmp.eq.s32.totalorder %s27, 1
    %p113 = por %p111, %p112
    %p115 = scmp.ne.s32.totalorder %s100, %s114
    %p116 = scmp.eq.s32.totalorder %s27, 0
    %p117 = por %p115, %p116
    %s119 = sadd.s32 %s118, 1
    %p122 = scmp.eq.s32.totalorder %s21, 1
    %p123 = scmp.ne.s32.totalorder %s118, %s120
    %p124 = scmp.eq.s32.totalorder %s21, 0
    %p125 = por %p123, %p124
    %p126 = scmp.ne.s32.totalorder %s118, %s120
    %p127 = scmp.eq.s32.totalorder %s26, 1
    %p128 = por %p126, %p127
    %p129 = scmp.ne.s32.totalorder %s120, %s121
    %p130 = scmp.eq.s32.totalorder %s26, 0
    %p131 = por %p129, %p130
    %p132 = scmp.ne.s32.totalorder %s120, %s121
    %p133 = scmp.eq.s32.totalorder %s27, 1
    %p134 = por %p132, %p133
    %p136 = scmp.ne.s32.totalorder %s121, %s135
    %p137 = scmp.eq.s32.totalorder %s27, 0
    %p138 = por %p136, %p137
    %s140 = sadd.s32 %s139, 1
    %p143 = scmp.eq.s32.totalorder %s21, 1
    %p144 = scmp.ne.s32.totalorder %s139, %s141
    %p145 = scmp.eq.s32.totalorder %s21, 0
    %p146 = por %p144, %p145
    %p147 = scmp.ne.s32.totalorder %s139, %s141
    %p148 = scmp.eq.s32.totalorder %s26, 1
    %p149 = por %p147, %p148
    %p150 = scmp.ne.s32.totalorder %s141, %s142
    %p151 = scmp.eq.s32.totalorder %s26, 0
    %p152 = por %p150, %p151
    %p153 = scmp.ne.s32.totalorder %s141, %s142
    %p154 = scmp.eq.s32.totalorder %s27, 1
    %p155 = por %p153, %p154
    %p157 = scmp.ne.s32.totalorder %s142, %s156
    %p158 = scmp.eq.s32.totalorder %s27, 0
    %p159 = por %p157, %p158
    %s161 = sadd.s32 %s160, 1
    %p164 = scmp.eq.s32.totalorder %s21, 1
    %p165 = scmp.ne.s32.totalorder %s160, %s162
    %p166 = scmp.eq.s32.totalorder %s21, 0
    %p167 = por %p165, %p166
    %p168 = scmp.ne.s32.totalorder %s160, %s162
    %p169 = scmp.eq.s32.totalorder %s26, 1
    %p170 = por %p168, %p169
    %p171 = scmp.ne.s32.totalorder %s162, %s163
    %p172 = scmp.eq.s32.totalorder %s26, 0
    %p173 = por %p171, %p172
    %p174 = scmp.ne.s32.totalorder %s162, %s163
    %p175 = scmp.eq.s32.totalorder %s27, 1
    %p176 = por %p174, %p175
    %p178 = scmp.ne.s32.totalorder %s163, %s177
    %p179 = scmp.eq.s32.totalorder %s27, 0
    %p180 = por %p178, %p179
    %s182 = sadd.s32 %s181, 1
    %p185 = scmp.eq.s32.totalorder %s21, 1
    %p186 = scmp.ne.s32.totalorder %s181, %s183
    %p187 = scmp.eq.s32.totalorder %s21, 0
    %p188 = por %p186, %p187
    %p189 = scmp.ne.s32.totalorder %s181, %s183
    %p190 = scmp.eq.s32.totalorder %s26, 1
    %p191 = por %p189, %p190
    %p192 = scmp.ne.s32.totalorder %s183, %s184
    %p193 = scmp.eq.s32.totalorder %s26, 0
    %p194 = por %p192, %p193
    %p195 = scmp.ne.s32.totalorder %s183, %s184
    %p196 = scmp.eq.s32.totalorder %s27, 1
    %p197 = por %p195, %p196
    %p199 = scmp.ne.s32.totalorder %s184, %s198
    %p200 = scmp.eq.s32.totalorder %s27, 0
    %p201 = por %p199, %p200
    %s203 = sadd.s32 %s202, 1
    %p206 = scmp.eq.s32.totalorder %s21, 1
    %p207 = scmp.ne.s32.totalorder %s202, %s204
    %p208 = scmp.eq.s32.totalorder %s21, 0
    %p209 = por %p207, %p208
    %p210 = scmp.ne.s32.totalorder %s202, %s204
    %p211 = scmp.eq.s32.totalorder %s26, 1
    %p212 = por %p210, %p211
    %p213 = scmp.ne.s32.totalorder %s204, %s205
    %p214 = scmp.eq.s32.totalorder %s26, 0
    %p215 = por %p213, %p214
    %p216 = scmp.ne.s32.totalorder %s204, %s205
    %p217 = scmp.eq.s32.totalorder %s27, 1
    %p218 = por %p216, %p217
    %p220 = scmp.ne.s32.totalorder %s205, %s219
    %p221 = scmp.eq.s32.totalorder %s27, 0
    %p222 = por %p220, %p221
    %s224 = sadd.s32 %s223, 1
    %p227 = scmp.eq.s32.totalorder %s21, 1
    %p228 = scmp.ne.s32.totalorder %s223, %s225
    %p229 = scmp.eq.s32.totalorder %s21, 0
    %p230 = por %p228, %p229
    %p231 = scmp.ne.s32.totalorder %s223, %s225
    %p232 = scmp.eq.s32.totalorder %s26, 1
    %p233 = por %p231, %p232
    %p234 = scmp.ne.s32.totalorder %s225, %s226
    %p235 = scmp.eq.s32.totalorder %s26, 0
    %p236 = por %p234, %p235
    %p237 = scmp.ne.s32.totalorder %s225, %s226
    %p238 = scmp.eq.s32.totalorder %s27, 1
    %p239 = por %p237, %p238
    %p241 = scmp.ne.s32.totalorder %s226, %s240
    %p242 = scmp.eq.s32.totalorder %s27, 0
    %p243 = por %p241, %p242
    %s245 = sadd.s32 %s244, 1
    %p248 = scmp.eq.s32.totalorder %s21, 1
    %p249 = scmp.ne.s32.totalorder %s244, %s246
    %p250 = scmp.eq.s32.totalorder %s21, 0
    %p251 = por %p249, %p250
    %p252 = scmp.ne.s32.totalorder %s244, %s246
    %p253 = scmp.eq.s32.totalorder %s26, 1
    %p254 = por %p252, %p253
    %p255 = scmp.ne.s32.totalorder %s246, %s247
    %p256 = scmp.eq.s32.totalorder %s26, 0
    %p257 = por %p255, %p256
    %p258 = scmp.ne.s32.totalorder %s246, %s247
    %p259 = scmp.eq.s32.totalorder %s27, 1
    %p260 = por %p258, %p259
    %p262 = scmp.ne.s32.totalorder %s247, %s261
    %p263 = scmp.eq.s32.totalorder %s27, 0
    %p264 = por %p262, %p263
    %s266 = sadd.s32 %s265, 1
    %p269 = scmp.eq.s32.totalorder %s21, 1
    %p270 = scmp.ne.s32.totalorder %s265, %s267
    %p271 = scmp.eq.s32.totalorder %s21, 0
    %p272 = por %p270, %p271
    %p273 = scmp.ne.s32.totalorder %s265, %s267
    %p274 = scmp.eq.s32.totalorder %s26, 1
    %p275 = por %p273, %p274
    %p276 = scmp.ne.s32.totalorder %s267, %s268
    %p277 = scmp.eq.s32.totalorder %s26, 0
    %p278 = por %p276, %p277
    %p279 = scmp.ne.s32.totalorder %s267, %s268
    %p280 = scmp.eq.s32.totalorder %s27, 1
    %p281 = por %p279, %p280
    %p283 = scmp.ne.s32.totalorder %s268, %s282
    %p284 = scmp.eq.s32.totalorder %s27, 0
    %p285 = por %p283, %p284
    %s287 = sadd.s32 %s286, 1
    %p290 = scmp.eq.s32.totalorder %s21, 1
    %p291 = scmp.ne.s32.totalorder %s286, %s288
    %p292 = scmp.eq.s32.totalorder %s21, 0
    %p293 = por %p291, %p292
    %p294 = scmp.ne.s32.totalorder %s286, %s288
    %p295 = scmp.eq.s32.totalorder %s26, 1
    %p296 = por %p294, %p295
    %p297 = scmp.ne.s32.totalorder %s288, %s289
    %p298 = scmp.eq.s32.totalorder %s26, 0
    %p299 = por %p297, %p298
    %p300 = scmp.ne.s32.totalorder %s288, %s289
    %p301 = scmp.eq.s32.totalorder %s27, 1
    %p302 = por %p300, %p301
    %p304 = scmp.ne.s32.totalorder %s289, %s303
    %p305 = scmp.eq.s32.totalorder %s27, 0
    %p306 = por %p304, %p305
    %s308 = sadd.s32 %s307, 1
    %p311 = scmp.eq.s32.totalorder %s21, 1
    %p312 = scmp.ne.s32.totalorder %s307, %s309
    %p313 = scmp.eq.s32.totalorder %s21, 0
    %p314 = por %p312, %p313
    %p315 = scmp.ne.s32.totalorder %s307, %s309
    %p316 = scmp.eq.s32.totalorder %s26, 1
    %p317 = por %p315, %p316
    %p318 = scmp.ne.s32.totalorder %s309, %s310
    %p319 = scmp.eq.s32.totalorder %s26, 0
    %p320 = por %p318, %p319
    %p321 = scmp.ne.s32.totalorder %s309, %s310
    %p322 = scmp.eq.s32.totalorder %s27, 1
    %p323 = por %p321, %p322
    %p325 = scmp.ne.s32.totalorder %s310, %s324
    %p326 = scmp.eq.s32.totalorder %s27, 0
    %p327 = por %p325, %p326
    %s329 = sadd.s32 %s328, 1
    %p332 = scmp.eq.s32.totalorder %s21, 1
    %p333 = scmp.ne.s32.totalorder %s328, %s330
    %p334 = scmp.eq.s32.totalorder %s21, 0
    %p335 = por %p333, %p334
    %p336 = scmp.ne.s32.totalorder %s328, %s330
    %p337 = scmp.eq.s32.totalorder %s26, 1
    %p338 = por %p336, %p337
    %p339 = scmp.ne.s32.totalorder %s330, %s331
    %p340 = scmp.eq.s32.totalorder %s26, 0
    %p341 = por %p339, %p340
    %p342 = scmp.ne.s32.totalorder %s330, %s331
    %p343 = scmp.eq.s32.totalorder %s27, 1
    %p344 = por %p342, %p343
    %p346 = scmp.ne.s32.totalorder %s331, %s345
    %p347 = scmp.eq.s32.totalorder %s27, 0
    %p348 = por %p346, %p347
    %s349 = ssub.s32 %s21, %s28
    %p350 = scmp.eq.s32.totalorder %s349, 0
    %s352 = sadd.s32 %s351, 1
    %s353 = scalar_select %p350, %s351, %s352
    %p356 = pneg %p350
    %p357 = scmp.eq.s32.totalorder %s21, 1
    %p358 = por %p356, %p357
    %p359 = scmp.ne.s32.totalorder %s351, %s354
    %p360 = scmp.eq.s32.totalorder %s21, 0
    %p361 = por %p359, %p360
    %p362 = scmp.ne.s32.totalorder %s351, %s354
    %p363 = scmp.eq.s32.totalorder %s26, 1
    %p364 = por %p362, %p363
    %p365 = scmp.ne.s32.totalorder %s354, %s355
    %p366 = scmp.eq.s32.totalorder %s26, 0
    %p367 = por %p365, %p366
    %p368 = scmp.ne.s32.totalorder %s354, %s355
    %p369 = scmp.eq.s32.totalorder %s27, 1
    %p370 = por %p368, %p369
    %p372 = scmp.ne.s32.totalorder %s355, %s371
    %p373 = scmp.eq.s32.totalorder %s27, 0
    %p374 = por %p372, %p373
    %p375 = scmp.le.s32.totalorder 1, %s21
    %p376 = scmp.lt.s32.totalorder %s21, 3
    %p377 = pnand %p375, %p376
    %p378 = pneg %p377
    // Predicated region
    $region9: #{surel_forward.1} parent=5 // pred_check
      _
    $region10: #{surel_forward.1} parent=5 // pred_check_branch
      %380 = sbr.rel (%p377) target = $region12
    $region11: #{surel_forward.1} parent=5 // pred_region
      %s381 = ssub.s32 %s21, 1
      // Predicated region
      $region13: #{surel_forward.1} parent=11 // pred_check
        %p382 = pneg %p68
      $region14: #{surel_forward.1} parent=11 // pred_check_branch
        %384 = sbr.rel (%p382) target = $region16
      $region15: #{surel_forward.1} parent=11 // pred_region
        _
      $region16: #{surel_forward.1} parent=11 // pred_fallthru
        _
      // Predicated region
      $region17: #{surel_forward.1} parent=11 // pred_check
        %p385 = pneg %p89
      $region18: #{surel_forward.1} parent=11 // pred_check_branch
        %387 = sbr.rel (%p385) target = $region20
      $region19: #{surel_forward.1} parent=11 // pred_region
        _
      $region20: #{surel_forward.1} parent=11 // pred_fallthru
        _
      // Predicated region
      $region21: #{surel_forward.1} parent=11 // pred_check
        %p388 = pneg %p110
      $region22: #{surel_forward.1} parent=11 // pred_check_branch
        %390 = sbr.rel (%p388) target = $region24
      $region23: #{surel_forward.1} parent=11 // pred_region
        _
      $region24: #{surel_forward.1} parent=11 // pred_fallthru
        _
      // Predicated region
      $region25: #{surel_forward.1} parent=11 // pred_check
        %p391 = pneg %p131
      $region26: #{surel_forward.1} parent=11 // pred_check_branch
        %393 = sbr.rel (%p391) target = $region28
      $region27: #{surel_forward.1} parent=11 // pred_region
        _
      $region28: #{surel_forward.1} parent=11 // pred_fallthru
        _
      // Predicated region
      $region29: #{surel_forward.1} parent=11 // pred_check
        %p394 = pneg %p152
      $region30: #{surel_forward.1} parent=11 // pred_check_branch
        %396 = sbr.rel (%p394) target = $region32
      $region31: #{surel_forward.1} parent=11 // pred_region
        _
      $region32: #{surel_forward.1} parent=11 // pred_fallthru
        _
      // Predicated region
      $region33: #{surel_forward.1} parent=11 // pred_check
        %p397 = pneg %p173
      $region34: #{surel_forward.1} parent=11 // pred_check_branch
        %399 = sbr.rel (%p397) target = $region36
      $region35: #{surel_forward.1} parent=11 // pred_region
        _
      $region36: #{surel_forward.1} parent=11 // pred_fallthru
        _
      // Predicated region
      $region37: #{surel_forward.1} parent=11 // pred_check
        %p400 = pneg %p194
      $region38: #{surel_forward.1} parent=11 // pred_check_branch
        %402 = sbr.rel (%p400) target = $region40
      $region39: #{surel_forward.1} parent=11 // pred_region
        _
      $region40: #{surel_forward.1} parent=11 // pred_fallthru
        _
      // Predicated region
      $region41: #{surel_forward.1} parent=11 // pred_check
        %p403 = pneg %p215
      $region42: #{surel_forward.1} parent=11 // pred_check_branch
        %405 = sbr.rel (%p403) target = $region44
      $region43: #{surel_forward.1} parent=11 // pred_region
        _
      $region44: #{surel_forward.1} parent=11 // pred_fallthru
        _
      // Predicated region
      $region45: #{surel_forward.1} parent=11 // pred_check
        %p406 = pneg %p236
      $region46: #{surel_forward.1} parent=11 // pred_check_branch
        %408 = sbr.rel (%p406) target = $region48
      $region47: #{surel_forward.1} parent=11 // pred_region
        _
      $region48: #{surel_forward.1} parent=11 // pred_fallthru
        _
      // Predicated region
      $region49: #{surel_forward.1} parent=11 // pred_check
        %p409 = pneg %p257
      $region50: #{surel_forward.1} parent=11 // pred_check_branch
        %411 = sbr.rel (%p409) target = $region52
      $region51: #{surel_forward.1} parent=11 // pred_region
        _
      $region52: #{surel_forward.1} parent=11 // pred_fallthru
        _
      // Predicated region
      $region53: #{surel_forward.1} parent=11 // pred_check
        %p412 = pneg %p278
      $region54: #{surel_forward.1} parent=11 // pred_check_branch
        %414 = sbr.rel (%p412) target = $region56
      $region55: #{surel_forward.1} parent=11 // pred_region
        _
      $region56: #{surel_forward.1} parent=11 // pred_fallthru
        _
      // Predicated region
      $region57: #{surel_forward.1} parent=11 // pred_check
        %p415 = pneg %p299
      $region58: #{surel_forward.1} parent=11 // pred_check_branch
        %417 = sbr.rel (%p415) target = $region60
      $region59: #{surel_forward.1} parent=11 // pred_region
        _
      $region60: #{surel_forward.1} parent=11 // pred_fallthru
        _
      // Predicated region
      $region61: #{surel_forward.1} parent=11 // pred_check
        %p418 = pneg %p320
      $region62: #{surel_forward.1} parent=11 // pred_check_branch
        %420 = sbr.rel (%p418) target = $region64
      $region63: #{surel_forward.1} parent=11 // pred_region
        _
      $region64: #{surel_forward.1} parent=11 // pred_fallthru
        _
      // Predicated region
      $region65: #{surel_forward.1} parent=11 // pred_check
        %p421 = pneg %p341
      $region66: #{surel_forward.1} parent=11 // pred_check_branch
        %423 = sbr.rel (%p421) target = $region68
      $region67: #{surel_forward.1} parent=11 // pred_region
        _
      $region68: #{surel_forward.1} parent=11 // pred_fallthru
        _
    $region12: #{surel_forward.1} parent=5 // pred_fallthru
      _
    %p424 = scmp.lt.s32.totalorder %s21, 2
    // Predicated region
    $region69: #{surel_forward.1} parent=5 // pred_check
      %p425 = pneg %p424
    $region70: #{surel_forward.1} parent=5 // pred_check_branch
      %427 = sbr.rel (%p425) target = $region72
    $region71: #{surel_forward.1} parent=5 // pred_region
      // Predicated region
      $region73: #{surel_forward.1} parent=71 // pred_check
        %p428 = pneg %p41
      $region74: #{surel_forward.1} parent=71 // pred_check_branch
        %430 = sbr.rel (%p428) target = $region76
      $region75: #{surel_forward.1} parent=71 // pred_region
        %p431 = scmp.lt.s32.totalorder %s21, 1
        %s432 = scalar_select %p431, %s21, 1
        %s433 = smul.addr %s432, 8
        %s434 = smul.addr %s433, 4
        %s435 = scalar_lea.vmem %s0, %s434
      $region76: #{surel_forward.1} parent=71 // pred_fallthru
        _
    $region72: #{surel_forward.1} parent=5 // pred_fallthru
      _
    %p436 = scmp.le.s32.totalorder 1, %s21
    %p437 = scmp.lt.s32.totalorder %s21, 3
    %p438 = pnand %p436, %p437
    %p439 = pneg %p438
    // Predicated region
    $region77: #{surel_forward.1} parent=5 // pred_check
      _
    $region78: #{surel_forward.1} parent=5 // pred_check_branch
      %441 = sbr.rel (%p438) target = $region80
    $region79: #{surel_forward.1} parent=5 // pred_region
      %s442 = ssub.s32 %s21, 1
      %p443 = scmp.lt.s32.totalorder %s26, 1
      %s444 = scalar_select %p443, %s26, 1
      %s445 = smul.addr %s444, 8
      %s446 = smul.addr %s445, 4
      %s447 = scalar_lea.vmem %s0, %s446
      %p448 = pneg %p47
      %p449 = pneg %p44
      %p450 = pneg %p68
      %p451 = pneg %p65
      %p452 = pneg %p89
      %p453 = pneg %p86
      %p454 = pneg %p110
      %p455 = pneg %p107
      %p456 = pneg %p131
      %p457 = pneg %p128
      %p458 = pneg %p152
      %p459 = pneg %p149
      %p460 = pneg %p173
      %p461 = pneg %p170
      %p462 = pneg %p194
      %p463 = pneg %p191
      %p464 = pneg %p215
      %p465 = pneg %p212
      %p466 = pneg %p236
      %p467 = pneg %p233
      %p468 = pneg %p257
      %p469 = pneg %p254
      %p470 = pneg %p278
      %p471 = pneg %p275
      %p472 = pneg %p299
      %p473 = pneg %p296
      %p474 = pneg %p320
      %p475 = pneg %p317
      %p476 = pneg %p341
      %p477 = pneg %p338
      %p478 = pneg %p367
      %p479 = pneg %p364
      %p480 = scmp.lt.s32.totalorder %s26, 1
      %s481 = scalar_select %p480, %s26, 1
      %s482 = scalar_lea.vmem %s15, %s481
      %p483 = scmp.lt.s32.totalorder %s26, 1
      %s484 = scalar_select %p483, %s26, 1
      %s485 = smul.addr %s484, 8
      %s486 = smul.addr %s485, 4
      %s487 = scalar_lea.vmem %s0, %s486
      %p488 = scmp.lt.s32.totalorder %s26, 1
      %s489 = scalar_select %p488, %s26, 1
      %s490 = scalar_lea.vmem %s15, %s489
      %v492 = vld [vmem:[%s487] sm:$0xf]
      %v493 = vld [vmem:[%s487 + $0x4] sm:$0xf]
      %v494 = vld [vmem:[%s487 + $0x8] sm:$0xf]
      %v495 = vld [vmem:[%s487 + $0xc] sm:$0xf]
      %v496 = vld [vmem:[%s487 + $0x10] sm:$0xf]
      %v497 = vld [vmem:[%s487 + $0x14] sm:$0xf]
      %v498 = vld [vmem:[%s487 + $0x18] sm:$0xf]
      %v499 = vld [vmem:[%s487 + $0x1c] sm:$0xf]
      %v500 = vld [vmem:[%s1] sm:$0xf]
      %v501 = vld [vmem:[%s2] sm:$0x1]
      %v503 = vperm.slane %v501, 0
      %v513 = vunpack.c.l.b16 %v492
      %v514 = vunpack.c.l.b16 %v493
      %v515 = vunpack.c.l.b16 %v494
      %v516 = vunpack.c.l.b16 %v495
      %v517 = vunpack.c.l.b16 %v496
      %v518 = vunpack.c.l.b16 %v497
      %v519 = vunpack.c.l.b16 %v498
      %v520 = vunpack.c.l.b16 %v499
      %v521 = vpack.c.b16 %v514, %v513
      %v522 = vpack.c.b16 %v516, %v515
      %v523 = vpack.c.b16 %v518, %v517
      %v524 = vpack.c.b16 %v520, %v519
      %vm525 = vcmask 64512
      %v527 = vsel %vm525, %v521, 0
      %v530 = vsel %vm525, %v522, 0
      %v533 = vsel %vm525, %v523, 0
      %v536 = vsel %vm525, %v524, 0
      %vm538 = vcmask 1043456
      %v540 = vsel %vm538, %v500, 0
      %542 = vmatpush.bf16.msra.mxu0 0
      %543 = vmatpush.bf16.msra.mxu0 0
      %544 = vmatpush.bf16.msra.mxu0 0
      %545 = vmatpush.bf16.msra.mxu0 0
      %546 = vmatpush.bf16.msra.mxu0 0
      %547 = vmatpush.bf16.msra.mxu0 0
      %548 = vmatpush.bf16.msra.mxu0 0
      %549 = vmatpush.bf16.msra.mxu0 %v540
      %550 = vmatmul.bf16.gmra.mxu0 %v527
      %v551 = vpop.f32.mrf.mxu0
      %v552 = vadd.f32 %v503, %v551
      %v553 = vpop.f32.mrf.mxu0
      %v554 = vadd.f32 %v503, %v553
      %555 = vmatmul.bf16.gmra.mxu0 %v530
      %v556 = vpop.f32.mrf.mxu0
      %v557 = vadd.f32 %v503, %v556
      %v558 = vpop.f32.mrf.mxu0
      %v559 = vadd.f32 %v503, %v558
      %560 = vmatmul.bf16.gmra.mxu0 %v533
      %v561 = vpop.f32.mrf.mxu0
      %v562 = vadd.f32 %v503, %v561
      %v563 = vpop.f32.mrf.mxu0
      %v564 = vadd.f32 %v503, %v563
      %565 = vmatmul.bf16.gmra.mxu0 %v536
      %v566 = vpop.f32.mrf.mxu0
      %v567 = vadd.f32 %v503, %v566
      %v568 = vpop.f32.mrf.mxu0
      %v569 = vadd.f32 %v503, %v568
      %570 = vdwg.mxu0
      %v571 = vmax.f32 %v552, 0.0
      %v572 = vmax.f32 %v554, 0.0
      %v573 = vmax.f32 %v557, 0.0
      %v574 = vmax.f32 %v559, 0.0
      %v575 = vmax.f32 %v562, 0.0
      %v576 = vmax.f32 %v564, 0.0
      %v577 = vmax.f32 %v567, 0.0
      %v578 = vmax.f32 %v569, 0.0
      %v579 = vpack.c.bf16 %v572, %v571
      %v580 = vpack.c.bf16 %v574, %v573
      %v581 = vpack.c.bf16 %v576, %v575
      %v582 = vpack.c.bf16 %v578, %v577
      %v583 = vld [vmem:[%s3] sm:$0xf]
      %v584 = vld [vmem:[%s3 + $0x4] sm:$0xf]
      %v585 = vld [vmem:[%s3 + $0x8] sm:$0xf]
      %v586 = vld [vmem:[%s3 + $0xc] sm:$0xf]
      %v587 = vld [vmem:[%s3 + $0x10] sm:$0xf]
      %v588 = vld [vmem:[%s3 + $0x14] sm:$0xf]
      %v589 = vld [vmem:[%s3 + $0x18] sm:$0xf]
      %v590 = vld [vmem:[%s3 + $0x1c] sm:$0xf]
      %v591 = vld [vmem:[%s4] sm:$0x1]
      %v593 = vperm.slane %v591, 0
      %v603 = vunpack.c.l.b16 %v583
      %v604 = vunpack.c.l.b16 %v584
      %v605 = vunpack.c.l.b16 %v585
      %v606 = vunpack.c.l.b16 %v586
      %v607 = vunpack.c.l.b16 %v587
      %v608 = vunpack.c.l.b16 %v588
      %v609 = vunpack.c.l.b16 %v589
      %v610 = vunpack.c.l.b16 %v590
      %v611 = vpack.c.b16 %v604, %v603
      %v612 = vpack.c.b16 %v606, %v605
      %v613 = vpack.c.b16 %v608, %v607
      %v614 = vpack.c.b16 %v610, %v609
      %vm619 = vcmask 523264
      %v621 = vsel %vm619, %v579, 0
      %v624 = vsel %vm619, %v580, 0
      %v627 = vsel %vm619, %v581, 0
      %v630 = vsel %vm619, %v582, 0
      %632 = vmatpush.bf16.msra.mxu0 0
      %633 = vmatpush.bf16.msra.mxu0 0
      %634 = vmatpush.bf16.msra.mxu0 0
      %635 = vmatpush.bf16.msra.mxu0 0
      %636 = vmatpush.bf16.msra.mxu0 %v614
      %637 = vmatpush.bf16.msra.mxu0 %v613
      %638 = vmatpush.bf16.msra.mxu0 %v612
      %639 = vmatpush.bf16.msra.mxu0 %v611
      %640 = vmatmul.bf16.gmra.mxu0 %v621
      %v641 = vpop.f32.mrf.mxu0
      %v642 = vadd.f32 %v593, %v641
      %v643 = vpop.f32.mrf.mxu0
      %v644 = vadd.f32 %v593, %v643
      %645 = vmatmul.bf16.gmra.mxu0 %v624
      %v646 = vpop.f32.mrf.mxu0
      %v647 = vadd.f32 %v593, %v646
      %v648 = vpop.f32.mrf.mxu0
      %v649 = vadd.f32 %v593, %v648
      %650 = vmatmul.bf16.gmra.mxu0 %v627
      %v651 = vpop.f32.mrf.mxu0
      %v652 = vadd.f32 %v593, %v651
      %v653 = vpop.f32.mrf.mxu0
      %v654 = vadd.f32 %v593, %v653
      %655 = vmatmul.bf16.gmra.mxu0 %v630
      %v656 = vpop.f32.mrf.mxu0
      %v657 = vadd.f32 %v593, %v656
      %v658 = vpop.f32.mrf.mxu0
      %v659 = vadd.f32 %v593, %v658
      %660 = vdwg.mxu0
      %v661 = vmax.f32 %v642, 0.0
      %v662 = vmax.f32 %v644, 0.0
      %v663 = vmax.f32 %v647, 0.0
      %v664 = vmax.f32 %v649, 0.0
      %v665 = vmax.f32 %v652, 0.0
      %v666 = vmax.f32 %v654, 0.0
      %v667 = vmax.f32 %v657, 0.0
      %v668 = vmax.f32 %v659, 0.0
      %v669 = vpack.c.bf16 %v662, %v661
      %v670 = vpack.c.bf16 %v664, %v663
      %v671 = vpack.c.bf16 %v666, %v665
      %v672 = vpack.c.bf16 %v668, %v667
      %v673 = vld [vmem:[%s5] sm:$0xf]
      %v674 = vld [vmem:[%s5 + $0x4] sm:$0xf]
      %v675 = vld [vmem:[%s5 + $0x8] sm:$0xf]
      %v676 = vld [vmem:[%s5 + $0xc] sm:$0xf]
      %v677 = vld [vmem:[%s7] sm:$0x1]
      %v679 = vperm.slane %v677, 0
      %v685 = vunpack.c.l.b16 %v673
      %v686 = vunpack.c.l.b16 %v674
      %v687 = vunpack.c.l.b16 %v675
      %v688 = vunpack.c.l.b16 %v676
      %v689 = vpack.c.b16 %v686, %v685
      %v690 = vpack.c.b16 %v688, %v687
      %vm693 = vcmask 261120
      %v695 = vsel %vm693, %v669, 0
      %v698 = vsel %vm693, %v670, 0
      %v701 = vsel %vm693, %v671, 0
      %v704 = vsel %vm693, %v672, 0
      %706 = vmatpush.bf16.msra.mxu0 0
      %707 = vmatpush.bf16.msra.mxu0 0
      %708 = vmatpush.bf16.msra.mxu0 0
      %709 = vmatpush.bf16.msra.mxu0 0
      %710 = vmatpush.bf16.msra.mxu0 0
      %711 = vmatpush.bf16.msra.mxu0 0
      %712 = vmatpush.bf16.msra.mxu0 %v690
      %713 = vmatpush.bf16.msra.mxu0 %v689
      %714 = vmatmul.bf16.gmra.mxu0 %v695
      %v715 = vpop.f32.mrf.mxu0
      %v716 = vadd.f32 %v679, %v715
      %v717 = vpop.f32.mrf.mxu0
      %v718 = vadd.f32 %v679, %v717
      %719 = vmatmul.bf16.gmra.mxu0 %v698
      %v720 = vpop.f32.mrf.mxu0
      %v721 = vadd.f32 %v679, %v720
      %v722 = vpop.f32.mrf.mxu0
      %v723 = vadd.f32 %v679, %v722
      %724 = vmatmul.bf16.gmra.mxu0 %v701
      %v725 = vpop.f32.mrf.mxu0
      %v726 = vadd.f32 %v679, %v725
      %v727 = vpop.f32.mrf.mxu0
      %v728 = vadd.f32 %v679, %v727
      %729 = vmatmul.bf16.gmra.mxu0 %v704
      %v730 = vpop.f32.mrf.mxu0
      %v731 = vadd.f32 %v679, %v730
      %v732 = vpop.f32.mrf.mxu0
      %v733 = vadd.f32 %v679, %v732
      %734 = vdwg.mxu0
      %735 = vst [vmem:[#allocation2] sm:$0xff] %v716
      %736 = vst [vmem:[#allocation2 + $0x8] sm:$0xff] %v718
      %737 = vst [vmem:[#allocation2 + $0x10] sm:$0xff] %v721
      %738 = vst [vmem:[#allocation2 + $0x18] sm:$0xff] %v723
      %739 = vst [vmem:[#allocation2 + $0x20] sm:$0xff] %v726
      %740 = vst [vmem:[#allocation2 + $0x28] sm:$0xff] %v728
      %741 = vst [vmem:[#allocation2 + $0x30] sm:$0xff] %v731
      %742 = vst [vmem:[#allocation2 + $0x38] sm:$0xff] %v733
      %v743 = vld [vmem:[#allocation2] sm:$0xff]
      %v744 = vld [vmem:[#allocation2 + $0x8] sm:$0xff]
      %v745 = vld [vmem:[%s6] sm:$0xf]
      %v746 = vld [vmem:[%s6 + $0x4] sm:$0xf]
      %v747 = vld [vmem:[%s6 + $0x8] sm:$0xf]
      %v748 = vld [vmem:[%s6 + $0xc] sm:$0xf]
      %v753 = vunpack.c.l.b16 %v745
      %v754 = vunpack.c.l.b16 %v746
      %v755 = vunpack.c.l.b16 %v747
      %v756 = vunpack.c.l.b16 %v748
      %v757 = vpack.c.b16 %v754, %v753
      %v758 = vpack.c.b16 %v756, %v755
      %v762 = vsel %vm693, 0, 0
      %764 = vmatpush.bf16.msra.mxu0 0
      %765 = vmatpush.bf16.msra.mxu0 0
      %766 = vmatpush.bf16.msra.mxu0 0
      %767 = vmatpush.bf16.msra.mxu0 0
      %768 = vmatpush.bf16.msra.mxu0 0
      %769 = vmatpush.bf16.msra.mxu0 0
      %770 = vmatpush.bf16.msra.mxu0 %v758
      %771 = vmatpush.bf16.msra.mxu0 %v757
      %772 = vmatmul.bf16.gmra.mxu0 %v762
      %v773 = vpop.f32.mrf.mxu0
      %v774 = vadd.f32 0.0, %v773
      %v775 = vpop.f32.mrf.mxu0
      %v776 = vadd.f32 0.0, %v775
      %777 = vdwg.mxu0
      %v778 = vadd.f32 %v743, %v774
      %v779 = vadd.f32 %v744, %v776
      %v780 = vxor.u32 %v778, 2147483648
      %v781 = vxor.u32 %v779, 2147483648
      %v782 = vmul.f32 %v780, 1.442695
      %v783 = vpow.pop %v782
      %v784 = vmul.f32 %v781, 1.442695
      %v785 = vpow.pop %v784
      %v786 = vadd.f32 %v783, 1.0
      %v787 = vadd.f32 %v785, 1.0
      %v788 = vrcp.pop %v786
      %v789 = vmul.f32 %v786, %v788
      %v790 = vsub.f32 1.0, %v789
      %v791 = vmul.f32 %v788, %v790
      %v792 = vadd.f32 %v788, %v791
      %vm793 = vweird.f32 %v786
      %vm794 = vweird.f32 %v788
      %vm795 = vmor %vm793, %vm794
      %v796 = vsel %vm795, %v788, %v792
      %v797 = vand.u32 2147483647, %v786
      %vm798 = vcmp.eq.f32.partialorder %v797, 8.507059e+37
      %v799 = vand.u32 %v786, 2147483648
      %v800 = vor.u32 1.1754944e-38, %v799
      %v801 = vsel %vm798, %v800, %v796
      %v802 = vmul.f32 1.0, %v801
      %v803 = vrcp.pop %v787
      %v804 = vmul.f32 %v787, %v803
      %v805 = vsub.f32 1.0, %v804
      %v806 = vmul.f32 %v803, %v805
      %v807 = vadd.f32 %v803, %v806
      %vm808 = vweird.f32 %v787
      %vm809 = vweird.f32 %v803
      %vm810 = vmor %vm808, %vm809
      %v811 = vsel %vm810, %v803, %v807
      %v812 = vand.u32 2147483647, %v787
      %vm813 = vcmp.eq.f32.partialorder %v812, 8.507059e+37
      %v814 = vand.u32 %v787, 2147483648
      %v815 = vor.u32 1.1754944e-38, %v814
      %v816 = vsel %vm813, %v815, %v811
      %v817 = vmul.f32 1.0, %v816
      %v818 = vtanh.pop %v778
      %v819 = vtanh.pop %v779
      %v820 = vmul.f32 %v802, 0.0
      %v821 = vmul.f32 %v817, 0.0
      %824 = vrot.lane.b32.xlu0 %v818, 64
      %v825 = vpop.permute.xlu0 %824
      %826 = vrot.lane.b32.xlu0 %v819, 64
      %v827 = vpop.permute.xlu0 %826
      %v830 = vmul.f32 %v802, %v825
      %v831 = vmul.f32 %v817, %v827
      %834 = vrot.lane.b32.xlu0 %v830, 32
      %v835 = vpop.permute.xlu0 %834
      %836 = vrot.lane.b32.xlu0 %v831, 32
      %v837 = vpop.permute.xlu0 %836
      %v840 = vadd.f32 %v820, %v835
      %v841 = vadd.f32 %v821, %v837
      %v842 = vtanh.pop %v840
      %v843 = vtanh.pop %v841
      %846 = vrot.lane.b32.xlu0 %v842, 64
      %v847 = vpop.permute.xlu0 %846
      %848 = vrot.lane.b32.xlu0 %v843, 64
      %v849 = vpop.permute.xlu0 %848
      %v852 = vmul.f32 %v802, %v847
      %v853 = vmul.f32 %v817, %v849
      %v854 = vpack.c.bf16 %v853, %v852
      %v855 = vld [vmem:[%s8] sm:$0xf]
      %v856 = vld [vmem:[%s8 + $0x4] sm:$0xf]
      %v857 = vld [vmem:[%s8 + $0x8] sm:$0xf]
      %v858 = vld [vmem:[%s8 + $0xc] sm:$0xf]
      %v859 = vld [vmem:[%s9] sm:$0xf]
      %v860 = vld [vmem:[%s9 + $0x4] sm:$0xf]
      %v861 = vld [vmem:[%s9 + $0x8] sm:$0xf]
      %v862 = vld [vmem:[%s9 + $0xc] sm:$0xf]
      %v867 = vunpack.c.l.b16 %v859
      %v868 = vunpack.c.l.b16 %v860
      %v869 = vunpack.c.l.b16 %v861
      %v870 = vunpack.c.l.b16 %v862
      %v871 = vpack.c.b16 %v868, %v867
      %v872 = vpack.c.b16 %v870, %v869
      %875 = vmatpush.bf16.msra.mxu0 0
      %876 = vmatpush.bf16.msra.mxu0 0
      %877 = vmatpush.bf16.msra.mxu0 0
      %878 = vmatpush.bf16.msra.mxu0 0
      %879 = vmatpush.bf16.msra.mxu0 0
      %880 = vmatpush.bf16.msra.mxu0 0
      %881 = vmatpush.bf16.msra.mxu0 %v872
      %882 = vmatpush.bf16.msra.mxu0 %v871
      %883 = vmatmul.bf16.gmra.mxu0 %v762
      %v884 = vpop.f32.mrf.mxu0
      %v885 = vadd.f32 0.0, %v884
      %v886 = vpop.f32.mrf.mxu0
      %v887 = vadd.f32 0.0, %v886
      %888 = vdwg.mxu0
      %890 = vrot.lane.b32.xlu0 %v854, 32
      %v891 = vpop.permute.xlu0 %890
      %v896 = vunpack.c.l.b16 %v855
      %v897 = vunpack.c.l.b16 %v856
      %v898 = vunpack.c.l.b16 %v857
      %v899 = vunpack.c.l.b16 %v858
      %v900 = vpack.c.b16 %v897, %v896
      %v901 = vpack.c.b16 %v899, %v898
      %v905 = vsel %vm693, %v891, 0
      %907 = vmatpush.bf16.msra.mxu0 0
      %908 = vmatpush.bf16.msra.mxu0 0
      %909 = vmatpush.bf16.msra.mxu0 0
      %910 = vmatpush.bf16.msra.mxu0 0
      %911 = vmatpush.bf16.msra.mxu0 0
      %912 = vmatpush.bf16.msra.mxu0 0
      %913 = vmatpush.bf16.msra.mxu0 %v901
      %914 = vmatpush.bf16.msra.mxu0 %v900
      %915 = vmatmul.bf16.gmra.mxu0 %v905
      %v916 = vpop.f32.mrf.mxu0
      %v917 = vadd.f32 %v885, %v916
      %v918 = vpop.f32.mrf.mxu0
      %v919 = vadd.f32 %v887, %v918
      %920 = vdwg.mxu0
      %v921 = vld [vmem:[%s10] sm:$0x1]
      %v923 = vperm.slane %v921, 0
      %v925 = vadd.f32 %v917, %v923
      %v926 = vadd.f32 %v919, %v923
      %v927 = vxor.u32 %v925, 2147483648
      %v928 = vxor.u32 %v926, 2147483648
      %v929 = vmul.f32 %v927, 1.442695
      %v930 = vpow.pop %v929
      %v931 = vmul.f32 %v928, 1.442695
      %v932 = vpow.pop %v931
      %v933 = vadd.f32 %v930, 1.0
      %v934 = vadd.f32 %v932, 1.0
      %v935 = vrcp.pop %v933
      %v936 = vmul.f32 %v933, %v935
      %v937 = vsub.f32 1.0, %v936
      %v938 = vmul.f32 %v935, %v937
      %v939 = vadd.f32 %v935, %v938
      %vm940 = vweird.f32 %v933
      %vm941 = vweird.f32 %v935
      %vm942 = vmor %vm940, %vm941
      %v943 = vsel %vm942, %v935, %v939
      %v944 = vand.u32 2147483647, %v933
      %vm945 = vcmp.eq.f32.partialorder %v944, 8.507059e+37
      %v946 = vand.u32 %v933, 2147483648
      %v947 = vor.u32 1.1754944e-38, %v946
      %v948 = vsel %vm945, %v947, %v943
      %v949 = vmul.f32 1.0, %v948
      %v950 = vrcp.pop %v934
      %v951 = vmul.f32 %v934, %v950
      %v952 = vsub.f32 1.0, %v951
      %v953 = vmul.f32 %v950, %v952
      %v954 = vadd.f32 %v950, %v953
      %vm955 = vweird.f32 %v934
      %vm956 = vweird.f32 %v950
      %vm957 = vmor %vm955, %vm956
      %v958 = vsel %vm957, %v950, %v954
      %v959 = vand.u32 2147483647, %v934
      %vm960 = vcmp.eq.f32.partialorder %v959, 8.507059e+37
      %v961 = vand.u32 %v934, 2147483648
      %v962 = vor.u32 1.1754944e-38, %v961
      %v963 = vsel %vm960, %v962, %v958
      %v964 = vmul.f32 1.0, %v963
      %v965 = vtanh.pop %v925
      %v966 = vtanh.pop %v926
      %v967 = vmul.f32 %v949, 0.0
      %v968 = vmul.f32 %v964, 0.0
      %971 = vrot.lane.b32.xlu0 %v965, 64
      %v972 = vpop.permute.xlu0 %971
      %973 = vrot.lane.b32.xlu0 %v966, 64
      %v974 = vpop.permute.xlu0 %973
      %v977 = vmul.f32 %v949, %v972
      %v978 = vmul.f32 %v964, %v974
      %981 = vrot.lane.b32.xlu0 %v977, 32
      %v982 = vpop.permute.xlu0 %981
      %983 = vrot.lane.b32.xlu0 %v978, 32
      %v984 = vpop.permute.xlu0 %983
      %v987 = vadd.f32 %v967, %v982
      %v988 = vadd.f32 %v968, %v984
      %v989 = vtanh.pop %v987
      %v990 = vtanh.pop %v988
      %993 = vrot.lane.b32.xlu0 %v989, 64
      %v994 = vpop.permute.xlu0 %993
      %995 = vrot.lane.b32.xlu0 %v990, 64
      %v996 = vpop.permute.xlu0 %995
      %v999 = vmul.f32 %v949, %v994
      %v1000 = vmul.f32 %v964, %v996
      %s1001 = scalar_lea.vmem [#allocation2], 16
      %v1002 = vld [vmem:[%s1001] sm:$0xff]
      %v1003 = vld [vmem:[%s1001 + $0x8] sm:$0xff]
      %1004 = vmatpush.bf16.msra.mxu0 0
      %1005 = vmatpush.bf16.msra.mxu0 0
      %1006 = vmatpush.bf16.msra.mxu0 0
      %1007 = vmatpush.bf16.msra.mxu0 0
      %1008 = vmatpush.bf16.msra.mxu0 0
      %1009 = vmatpush.bf16.msra.mxu0 0
      %1010 = vmatpush.bf16.msra.mxu0 %v758
      %1011 = vmatpush.bf16.msra.mxu0 %v757
      %1012 = vmatmul.bf16.gmra.mxu0 %v905
      %v1013 = vpop.f32.mrf.mxu0
      %v1014 = vadd.f32 0.0, %v1013
      %v1015 = vpop.f32.mrf.mxu0
      %v1016 = vadd.f32 0.0, %v1015
      %1017 = vdwg.mxu0
      %v1018 = vadd.f32 %v1002, %v1014
      %v1019 = vadd.f32 %v1003, %v1016
      %v1020 = vxor.u32 %v1018, 2147483648
      %v1021 = vxor.u32 %v1019, 2147483648
      %v1022 = vmul.f32 %v1020, 1.442695
      %v1023 = vpow.pop %v1022
      %v1024 = vmul.f32 %v1021, 1.442695
      %v1025 = vpow.pop %v1024
      %v1026 = vadd.f32 %v1023, 1.0
      %v1027 = vadd.f32 %v1025, 1.0
      %v1028 = vrcp.pop %v1026
      %v1029 = vmul.f32 %v1026, %v1028
      %v1030 = vsub.f32 1.0, %v1029
      %v1031 = vmul.f32 %v1028, %v1030
      %v1032 = vadd.f32 %v1028, %v1031
      %vm1033 = vweird.f32 %v1026
      %vm1034 = vweird.f32 %v1028
      %vm1035 = vmor %vm1033, %vm1034
      %v1036 = vsel %vm1035, %v1028, %v1032
      %v1037 = vand.u32 2147483647, %v1026
      %vm1038 = vcmp.eq.f32.partialorder %v1037, 8.507059e+37
      %v1039 = vand.u32 %v1026, 2147483648
      %v1040 = vor.u32 1.1754944e-38, %v1039
      %v1041 = vsel %vm1038, %v1040, %v1036
      %v1042 = vmul.f32 1.0, %v1041
      %v1043 = vrcp.pop %v1027
      %v1044 = vmul.f32 %v1027, %v1043
      %v1045 = vsub.f32 1.0, %v1044
      %v1046 = vmul.f32 %v1043, %v1045
      %v1047 = vadd.f32 %v1043, %v1046
      %vm1048 = vweird.f32 %v1027
      %vm1049 = vweird.f32 %v1043
      %vm1050 = vmor %vm1048, %vm1049
      %v1051 = vsel %vm1050, %v1043, %v1047
      %v1052 = vand.u32 2147483647, %v1027
      %vm1053 = vcmp.eq.f32.partialorder %v1052, 8.507059e+37
      %v1054 = vand.u32 %v1027, 2147483648
      %v1055 = vor.u32 1.1754944e-38, %v1054
      %v1056 = vsel %vm1053, %v1055, %v1051
      %v1057 = vmul.f32 1.0, %v1056
      %v1058 = vtanh.pop %v1018
      %v1059 = vtanh.pop %v1019
      %v1060 = vmul.f32 %v1042, %v840
      %v1061 = vmul.f32 %v1057, %v841
      %1064 = vrot.lane.b32.xlu0 %v1058, 64
      %v1065 = vpop.permute.xlu0 %1064
      %1066 = vrot.lane.b32.xlu0 %v1059, 64
      %v1067 = vpop.permute.xlu0 %1066
      %v1070 = vmul.f32 %v1042, %v1065
      %v1071 = vmul.f32 %v1057, %v1067
      %1074 = vrot.lane.b32.xlu0 %v1070, 32
      %v1075 = vpop.permute.xlu0 %1074
      %1076 = vrot.lane.b32.xlu0 %v1071, 32
      %v1077 = vpop.permute.xlu0 %1076
      %v1080 = vadd.f32 %v1060, %v1075
      %v1081 = vadd.f32 %v1061, %v1077
      %v1082 = vtanh.pop %v1080
      %v1083 = vtanh.pop %v1081
      %1086 = vrot.lane.b32.xlu0 %v1082, 64
      %v1087 = vpop.permute.xlu0 %1086
      %1088 = vrot.lane.b32.xlu0 %v1083, 64
      %v1089 = vpop.permute.xlu0 %1088
      %v1092 = vmul.f32 %v1042, %v1087
      %v1093 = vmul.f32 %v1057, %v1089
      %v1094 = vpack.c.bf16 %v1093, %v1092
      %v1095 = vpack.c.bf16 %v1000, %v999
      %1097 = vrot.lane.b32.xlu0 %v1095, 32
      %v1098 = vpop.permute.xlu0 %1097
      %v1100 = vsel %vm693, %v1098, 0
      %1102 = vmatpush.bf16.msra.mxu0 0
      %1103 = vmatpush.bf16.msra.mxu0 0
      %1104 = vmatpush.bf16.msra.mxu0 0
      %1105 = vmatpush.bf16.msra.mxu0 0
      %1106 = vmatpush.bf16.msra.mxu0 0
      %1107 = vmatpush.bf16.msra.mxu0 0
      %1108 = vmatpush.bf16.msra.mxu0 %v872
      %1109 = vmatpush.bf16.msra.mxu0 %v871
      %1110 = vmatmul.bf16.gmra.mxu0 %v1100
      %v1111 = vpop.f32.mrf.mxu0
      %v1112 = vadd.f32 0.0, %v1111
      %v1113 = vpop.f32.mrf.mxu0
      %v1114 = vadd.f32 0.0, %v1113
      %1115 = vdwg.mxu0
      %1117 = vrot.lane.b32.xlu0 %v1094, 32
      %v1118 = vpop.permute.xlu0 %1117
      %v1120 = vsel %vm693, %v1118, 0
      %1122 = vmatpush.bf16.msra.mxu0 0
      %1123 = vmatpush.bf16.msra.mxu0 0
      %1124 = vmatpush.bf16.msra.mxu0 0
      %1125 = vmatpush.bf16.msra.mxu0 0
      %1126 = vmatpush.bf16.msra.mxu0 0
      %1127 = vmatpush.bf16.msra.mxu0 0
      %1128 = vmatpush.bf16.msra.mxu0 %v901
      %1129 = vmatpush.bf16.msra.mxu0 %v900
      %1130 = vmatmul.bf16.gmra.mxu0 %v1120
      %v1131 = vpop.f32.mrf.mxu0
      %v1132 = vadd.f32 %v1112, %v1131
      %v1133 = vpop.f32.mrf.mxu0
      %v1134 = vadd.f32 %v1114, %v1133
      %1135 = vdwg.mxu0
      %v1136 = vadd.f32 %v1132, %v923
      %v1137 = vadd.f32 %v1134, %v923
      %v1138 = vxor.u32 %v1136, 2147483648
      %v1139 = vxor.u32 %v1137, 2147483648
      %v1140 = vmul.f32 %v1138, 1.442695
      %v1141 = vpow.pop %v1140
      %v1142 = vmul.f32 %v1139, 1.442695
      %v1143 = vpow.pop %v1142
      %v1144 = vadd.f32 %v1141, 1.0
      %v1145 = vadd.f32 %v1143, 1.0
      %v1146 = vrcp.pop %v1144
      %v1147 = vmul.f32 %v1144, %v1146
      %v1148 = vsub.f32 1.0, %v1147
      %v1149 = vmul.f32 %v1146, %v1148
      %v1150 = vadd.f32 %v1146, %v1149
      %vm1151 = vweird.f32 %v1144
      %vm1152 = vweird.f32 %v1146
      %vm1153 = vmor %vm1151, %vm1152
      %v1154 = vsel %vm1153, %v1146, %v1150
      %v1155 = vand.u32 2147483647, %v1144
      %vm1156 = vcmp.eq.f32.partialorder %v1155, 8.507059e+37
      %v1157 = vand.u32 %v1144, 2147483648
      %v1158 = vor.u32 1.1754944e-38, %v1157
      %v1159 = vsel %vm1156, %v1158, %v1154
      %v1160 = vmul.f32 1.0, %v1159
      %v1161 = vrcp.pop %v1145
      %v1162 = vmul.f32 %v1145, %v1161
      %v1163 = vsub.f32 1.0, %v1162
      %v1164 = vmul.f32 %v1161, %v1163
      %v1165 = vadd.f32 %v1161, %v1164
      %vm1166 = vweird.f32 %v1145
      %vm1167 = vweird.f32 %v1161
      %vm1168 = vmor %vm1166, %vm1167
      %v1169 = vsel %vm1168, %v1161, %v1165
      %v1170 = vand.u32 2147483647, %v1145
      %vm1171 = vcmp.eq.f32.partialorder %v1170, 8.507059e+37
      %v1172 = vand.u32 %v1145, 2147483648
      %v1173 = vor.u32 1.1754944e-38, %v1172
      %v1174 = vsel %vm1171, %v1173, %v1169
      %v1175 = vmul.f32 1.0, %v1174
      %v1176 = vtanh.pop %v1136
      %v1177 = vtanh.pop %v1137
      %v1178 = vmul.f32 %v1160, %v987
      %v1179 = vmul.f32 %v1175, %v988
      %1182 = vrot.lane.b32.xlu0 %v1176, 64
      %v1183 = vpop.permute.xlu0 %1182
      %1184 = vrot.lane.b32.xlu0 %v1177, 64
      %v1185 = vpop.permute.xlu0 %1184
      %v1188 = vmul.f32 %v1160, %v1183
      %v1189 = vmul.f32 %v1175, %v1185
      %1192 = vrot.lane.b32.xlu0 %v1188, 32
      %v1193 = vpop.permute.xlu0 %1192
      %1194 = vrot.lane.b32.xlu0 %v1189, 32
      %v1195 = vpop.permute.xlu0 %1194
      %v1198 = vadd.f32 %v1178, %v1193
      %v1199 = vadd.f32 %v1179, %v1195
      %v1200 = vtanh.pop %v1198
      %v1201 = vtanh.pop %v1199
      %1204 = vrot.lane.b32.xlu0 %v1200, 64
      %v1205 = vpop.permute.xlu0 %1204
      %1206 = vrot.lane.b32.xlu0 %v1201, 64
      %v1207 = vpop.permute.xlu0 %1206
      %v1210 = vmul.f32 %v1160, %v1205
      %v1211 = vmul.f32 %v1175, %v1207
      %s1212 = scalar_lea.vmem [#allocation2], 32
      %v1213 = vld [vmem:[%s1212] sm:$0xff]
      %v1214 = vld [vmem:[%s1212 + $0x8] sm:$0xff]
      %1215 = vmatpush.bf16.msra.mxu0 0
      %1216 = vmatpush.bf16.msra.mxu0 0
      %1217 = vmatpush.bf16.msra.mxu0 0
      %1218 = vmatpush.bf16.msra.mxu0 0
      %1219 = vmatpush.bf16.msra.mxu0 0
      %1220 = vmatpush.bf16.msra.mxu0 0
      %1221 = vmatpush.bf16.msra.mxu0 %v758
      %1222 = vmatpush.bf16.msra.mxu0 %v757
      %1223 = vmatmul.bf16.gmra.mxu0 %v1120
      %v1224 = vpop.f32.mrf.mxu0
      %v1225 = vadd.f32 0.0, %v1224
      %v1226 = vpop.f32.mrf.mxu0
      %v1227 = vadd.f32 0.0, %v1226
      %1228 = vdwg.mxu0
      %v1229 = vadd.f32 %v1213, %v1225
      %v1230 = vadd.f32 %v1214, %v1227
      %v1231 = vxor.u32 %v1229, 2147483648
      %v1232 = vxor.u32 %v1230, 2147483648
      %v1233 = vmul.f32 %v1231, 1.442695
      %v1234 = vpow.pop %v1233
      %v1235 = vmul.f32 %v1232, 1.442695
      %v1236 = vpow.pop %v1235
      %v1237 = vadd.f32 %v1234, 1.0
      %v1238 = vadd.f32 %v1236, 1.0
      %v1239 = vrcp.pop %v1237
      %v1240 = vmul.f32 %v1237, %v1239
      %v1241 = vsub.f32 1.0, %v1240
      %v1242 = vmul.f32 %v1239, %v1241
      %v1243 = vadd.f32 %v1239, %v1242
      %vm1244 = vweird.f32 %v1237
      %vm1245 = vweird.f32 %v1239
      %vm1246 = vmor %vm1244, %vm1245
      %v1247 = vsel %vm1246, %v1239, %v1243
      %v1248 = vand.u32 2147483647, %v1237
      %vm1249 = vcmp.eq.f32.partialorder %v1248, 8.507059e+37
      %v1250 = vand.u32 %v1237, 2147483648
      %v1251 = vor.u32 1.1754944e-38, %v1250
      %v1252 = vsel %vm1249, %v1251, %v1247
      %v1253 = vmul.f32 1.0, %v1252
      %v1254 = vrcp.pop %v1238
      %v1255 = vmul.f32 %v1238, %v1254
      %v1256 = vsub.f32 1.0, %v1255
      %v1257 = vmul.f32 %v1254, %v1256
      %v1258 = vadd.f32 %v1254, %v1257
      %vm1259 = vweird.f32 %v1238
      %vm1260 = vweird.f32 %v1254
      %vm1261 = vmor %vm1259, %vm1260
      %v1262 = vsel %vm1261, %v1254, %v1258
      %v1263 = vand.u32 2147483647, %v1238
      %vm1264 = vcmp.eq.f32.partialorder %v1263, 8.507059e+37
      %v1265 = vand.u32 %v1238, 2147483648
      %v1266 = vor.u32 1.1754944e-38, %v1265
      %v1267 = vsel %vm1264, %v1266, %v1262
      %v1268 = vmul.f32 1.0, %v1267
      %v1269 = vtanh.pop %v1229
      %v1270 = vtanh.pop %v1230
      %v1271 = vmul.f32 %v1253, %v1080
      %v1272 = vmul.f32 %v1268, %v1081
      %1275 = vrot.lane.b32.xlu0 %v1269, 64
      %v1276 = vpop.permute.xlu0 %1275
      %1277 = vrot.lane.b32.xlu0 %v1270, 64
      %v1278 = vpop.permute.xlu0 %1277
      %v1281 = vmul.f32 %v1253, %v1276
      %v1282 = vmul.f32 %v1268, %v1278
      %1285 = vrot.lane.b32.xlu0 %v1281, 32
      %v1286 = vpop.permute.xlu0 %1285
      %1287 = vrot.lane.b32.xlu0 %v1282, 32
      %v1288 = vpop.permute.xlu0 %1287
      %v1291 = vadd.f32 %v1271, %v1286
      %v1292 = vadd.f32 %v1272, %v1288
      %v1293 = vtanh.pop %v1291
      %v1294 = vtanh.pop %v1292
      %1297 = vrot.lane.b32.xlu0 %v1293, 64
      %v1298 = vpop.permute.xlu0 %1297
      %1299 = vrot.lane.b32.xlu0 %v1294, 64
      %v1300 = vpop.permute.xlu0 %1299
      %v1303 = vmul.f32 %v1253, %v1298
      %v1304 = vmul.f32 %v1268, %v1300
      %v1305 = vpack.c.bf16 %v1304, %v1303
      %v1306 = vpack.c.bf16 %v1211, %v1210
      %1308 = vrot.lane.b32.xlu0 %v1306, 32
      %v1309 = vpop.permute.xlu0 %1308
      %v1311 = vsel %vm693, %v1309, 0
      %1313 = vmatpush.bf16.msra.mxu0 0
      %1314 = vmatpush.bf16.msra.mxu0 0
      %1315 = vmatpush.bf16.msra.mxu0 0
      %1316 = vmatpush.bf16.msra.mxu0 0
      %1317 = vmatpush.bf16.msra.mxu0 0
      %1318 = vmatpush.bf16.msra.mxu0 0
      %1319 = vmatpush.bf16.msra.mxu0 %v872
      %1320 = vmatpush.bf16.msra.mxu0 %v871
      %1321 = vmatmul.bf16.gmra.mxu0 %v1311
      %v1322 = vpop.f32.mrf.mxu0
      %v1323 = vadd.f32 0.0, %v1322
      %v1324 = vpop.f32.mrf.mxu0
      %v1325 = vadd.f32 0.0, %v1324
      %1326 = vdwg.mxu0
      %1328 = vrot.lane.b32.xlu0 %v1305, 32
      %v1329 = vpop.permute.xlu0 %1328
      %v1331 = vsel %vm693, %v1329, 0
      %1333 = vmatpush.bf16.msra.mxu0 0
      %1334 = vmatpush.bf16.msra.mxu0 0
      %1335 = vmatpush.bf16.msra.mxu0 0
      %1336 = vmatpush.bf16.msra.mxu0 0
      %1337 = vmatpush.bf16.msra.mxu0 0
      %1338 = vmatpush.bf16.msra.mxu0 0
      %1339 = vmatpush.bf16.msra.mxu0 %v901
      %1340 = vmatpush.bf16.msra.mxu0 %v900
      %1341 = vmatmul.bf16.gmra.mxu0 %v1331
      %v1342 = vpop.f32.mrf.mxu0
      %v1343 = vadd.f32 %v1323, %v1342
      %v1344 = vpop.f32.mrf.mxu0
      %v1345 = vadd.f32 %v1325, %v1344
      %1346 = vdwg.mxu0
      %v1347 = vadd.f32 %v1343, %v923
      %v1348 = vadd.f32 %v1345, %v923
      %v1349 = vxor.u32 %v1347, 2147483648
      %v1350 = vxor.u32 %v1348, 2147483648
      %v1351 = vmul.f32 %v1349, 1.442695
      %v1352 = vpow.pop %v1351
      %v1353 = vmul.f32 %v1350, 1.442695
      %v1354 = vpow.pop %v1353
      %v1355 = vadd.f32 %v1352, 1.0
      %v1356 = vadd.f32 %v1354, 1.0
      %v1357 = vrcp.pop %v1355
      %v1358 = vmul.f32 %v1355, %v1357
      %v1359 = vsub.f32 1.0, %v1358
      %v1360 = vmul.f32 %v1357, %v1359
      %v1361 = vadd.f32 %v1357, %v1360
      %vm1362 = vweird.f32 %v1355
      %vm1363 = vweird.f32 %v1357
      %vm1364 = vmor %vm1362, %vm1363
      %v1365 = vsel %vm1364, %v1357, %v1361
      %v1366 = vand.u32 2147483647, %v1355
      %vm1367 = vcmp.eq.f32.partialorder %v1366, 8.507059e+37
      %v1368 = vand.u32 %v1355, 2147483648
      %v1369 = vor.u32 1.1754944e-38, %v1368
      %v1370 = vsel %vm1367, %v1369, %v1365
      %v1371 = vmul.f32 1.0, %v1370
      %v1372 = vrcp.pop %v1356
      %v1373 = vmul.f32 %v1356, %v1372
      %v1374 = vsub.f32 1.0, %v1373
      %v1375 = vmul.f32 %v1372, %v1374
      %v1376 = vadd.f32 %v1372, %v1375
      %vm1377 = vweird.f32 %v1356
      %vm1378 = vweird.f32 %v1372
      %vm1379 = vmor %vm1377, %vm1378
      %v1380 = vsel %vm1379, %v1372, %v1376
      %v1381 = vand.u32 2147483647, %v1356
      %vm1382 = vcmp.eq.f32.partialorder %v1381, 8.507059e+37
      %v1383 = vand.u32 %v1356, 2147483648
      %v1384 = vor.u32 1.1754944e-38, %v1383
      %v1385 = vsel %vm1382, %v1384, %v1380
      %v1386 = vmul.f32 1.0, %v1385
      %v1387 = vtanh.pop %v1347
      %v1388 = vtanh.pop %v1348
      %v1389 = vmul.f32 %v1371, %v1198
      %v1390 = vmul.f32 %v1386, %v1199
      %1393 = vrot.lane.b32.xlu0 %v1387, 64
      %v1394 = vpop.permute.xlu0 %1393
      %1395 = vrot.lane.b32.xlu0 %v1388, 64
      %v1396 = vpop.permute.xlu0 %1395
      %v1399 = vmul.f32 %v1371, %v1394
      %v1400 = vmul.f32 %v1386, %v1396
      %1403 = vrot.lane.b32.xlu0 %v1399, 32
      %v1404 = vpop.permute.xlu0 %1403
      %1405 = vrot.lane.b32.xlu0 %v1400, 32
      %v1406 = vpop.permute.xlu0 %1405
      %v1409 = vadd.f32 %v1389, %v1404
      %v1410 = vadd.f32 %v1390, %v1406
      %v1411 = vtanh.pop %v1409
      %v1412 = vtanh.pop %v1410
      %1415 = vrot.lane.b32.xlu0 %v1411, 64
      %v1416 = vpop.permute.xlu0 %1415
      %1417 = vrot.lane.b32.xlu0 %v1412, 64
      %v1418 = vpop.permute.xlu0 %1417
      %v1421 = vmul.f32 %v1371, %v1416
      %v1422 = vmul.f32 %v1386, %v1418
      %s1423 = scalar_lea.vmem [#allocation2], 48
      %v1424 = vld [vmem:[%s1423] sm:$0xff]
      %v1425 = vld [vmem:[%s1423 + $0x8] sm:$0xff]
      %1426 = vmatpush.bf16.msra.mxu0 0
      %1427 = vmatpush.bf16.msra.mxu0 0
      %1428 = vmatpush.bf16.msra.mxu0 0
      %1429 = vmatpush.bf16.msra.mxu0 0
      %1430 = vmatpush.bf16.msra.mxu0 0
      %1431 = vmatpush.bf16.msra.mxu0 0
      %1432 = vmatpush.bf16.msra.mxu0 %v758
      %1433 = vmatpush.bf16.msra.mxu0 %v757
      %1434 = vmatmul.bf16.gmra.mxu0 %v1331
      %v1435 = vpop.f32.mrf.mxu0
      %v1436 = vadd.f32 0.0, %v1435
      %v1437 = vpop.f32.mrf.mxu0
      %v1438 = vadd.f32 0.0, %v1437
      %1439 = vdwg.mxu0
      %v1440 = vadd.f32 %v1424, %v1436
      %v1441 = vadd.f32 %v1425, %v1438
      %v1442 = vxor.u32 %v1440, 2147483648
      %v1443 = vxor.u32 %v1441, 2147483648
      %v1444 = vmul.f32 %v1442, 1.442695
      %v1445 = vpow.pop %v1444
      %v1446 = vmul.f32 %v1443, 1.442695
      %v1447 = vpow.pop %v1446
      %v1448 = vadd.f32 %v1445, 1.0
      %v1449 = vadd.f32 %v1447, 1.0
      %v1450 = vrcp.pop %v1448
      %v1451 = vmul.f32 %v1448, %v1450
      %v1452 = vsub.f32 1.0, %v1451
      %v1453 = vmul.f32 %v1450, %v1452
      %v1454 = vadd.f32 %v1450, %v1453
      %vm1455 = vweird.f32 %v1448
      %vm1456 = vweird.f32 %v1450
      %vm1457 = vmor %vm1455, %vm1456
      %v1458 = vsel %vm1457, %v1450, %v1454
      %v1459 = vand.u32 2147483647, %v1448
      %vm1460 = vcmp.eq.f32.partialorder %v1459, 8.507059e+37
      %v1461 = vand.u32 %v1448, 2147483648
      %v1462 = vor.u32 1.1754944e-38, %v1461
      %v1463 = vsel %vm1460, %v1462, %v1458
      %v1464 = vmul.f32 1.0, %v1463
      %v1465 = vrcp.pop %v1449
      %v1466 = vmul.f32 %v1449, %v1465
      %v1467 = vsub.f32 1.0, %v1466
      %v1468 = vmul.f32 %v1465, %v1467
      %v1469 = vadd.f32 %v1465, %v1468
      %vm1470 = vweird.f32 %v1449
      %vm1471 = vweird.f32 %v1465
      %vm1472 = vmor %vm1470, %vm1471
      %v1473 = vsel %vm1472, %v1465, %v1469
      %v1474 = vand.u32 2147483647, %v1449
      %vm1475 = vcmp.eq.f32.partialorder %v1474, 8.507059e+37
      %v1476 = vand.u32 %v1449, 2147483648
      %v1477 = vor.u32 1.1754944e-38, %v1476
      %v1478 = vsel %vm1475, %v1477, %v1473
      %v1479 = vmul.f32 1.0, %v1478
      %v1480 = vtanh.pop %v1440
      %v1481 = vtanh.pop %v1441
      %v1482 = vmul.f32 %v1464, %v1291
      %v1483 = vmul.f32 %v1479, %v1292
      %1486 = vrot.lane.b32.xlu0 %v1480, 64
      %v1487 = vpop.permute.xlu0 %1486
      %1488 = vrot.lane.b32.xlu0 %v1481, 64
      %v1489 = vpop.permute.xlu0 %1488
      %v1492 = vmul.f32 %v1464, %v1487
      %v1493 = vmul.f32 %v1479, %v1489
      %1496 = vrot.lane.b32.xlu0 %v1492, 32
      %v1497 = vpop.permute.xlu0 %1496
      %1498 = vrot.lane.b32.xlu0 %v1493, 32
      %v1499 = vpop.permute.xlu0 %1498
      %v1502 = vadd.f32 %v1482, %v1497
      %v1503 = vadd.f32 %v1483, %v1499
      %v1504 = vtanh.pop %v1502
      %v1505 = vtanh.pop %v1503
      %1508 = vrot.lane.b32.xlu0 %v1504, 64
      %v1509 = vpop.permute.xlu0 %1508
      %1510 = vrot.lane.b32.xlu0 %v1505, 64
      %v1511 = vpop.permute.xlu0 %1510
      %v1514 = vmul.f32 %v1464, %v1509
      %v1515 = vmul.f32 %v1479, %v1511
      %v1516 = vpack.c.bf16 %v1515, %v1514
      %v1517 = vpack.c.bf16 %v1422, %v1421
      %1519 = vrot.lane.b32.xlu0 %v1517, 32
      %v1520 = vpop.permute.xlu0 %1519
      %v1522 = vsel %vm693, %v1520, 0
      %1524 = vmatpush.bf16.msra.mxu0 0
      %1525 = vmatpush.bf16.msra.mxu0 0
      %1526 = vmatpush.bf16.msra.mxu0 0
      %1527 = vmatpush.bf16.msra.mxu0 0
      %1528 = vmatpush.bf16.msra.mxu0 0
      %1529 = vmatpush.bf16.msra.mxu0 0
      %1530 = vmatpush.bf16.msra.mxu0 %v872
      %1531 = vmatpush.bf16.msra.mxu0 %v871
      %1532 = vmatmul.bf16.gmra.mxu0 %v1522
      %v1533 = vpop.f32.mrf.mxu0
      %v1534 = vadd.f32 0.0, %v1533
      %v1535 = vpop.f32.mrf.mxu0
      %v1536 = vadd.f32 0.0, %v1535
      %1537 = vdwg.mxu0
      %1539 = vrot.lane.b32.xlu0 %v1516, 32
      %v1540 = vpop.permute.xlu0 %1539
      %v1542 = vsel %vm693, %v1540, 0
      %1544 = vmatpush.bf16.msra.mxu0 0
      %1545 = vmatpush.bf16.msra.mxu0 0
      %1546 = vmatpush.bf16.msra.mxu0 0
      %1547 = vmatpush.bf16.msra.mxu0 0
      %1548 = vmatpush.bf16.msra.mxu0 0
      %1549 = vmatpush.bf16.msra.mxu0 0
      %1550 = vmatpush.bf16.msra.mxu0 %v901
      %1551 = vmatpush.bf16.msra.mxu0 %v900
      %1552 = vmatmul.bf16.gmra.mxu0 %v1542
      %v1553 = vpop.f32.mrf.mxu0
      %v1554 = vadd.f32 %v1534, %v1553
      %v1555 = vpop.f32.mrf.mxu0
      %v1556 = vadd.f32 %v1536, %v1555
      %1557 = vdwg.mxu0
      %v1558 = vadd.f32 %v1554, %v923
      %v1559 = vadd.f32 %v1556, %v923
      %v1560 = vxor.u32 %v1558, 2147483648
      %v1561 = vxor.u32 %v1559, 2147483648
      %v1562 = vmul.f32 %v1560, 1.442695
      %v1563 = vpow.pop %v1562
      %v1564 = vmul.f32 %v1561, 1.442695
      %v1565 = vpow.pop %v1564
      %v1566 = vadd.f32 %v1563, 1.0
      %v1567 = vadd.f32 %v1565, 1.0
      %v1568 = vrcp.pop %v1566
      %v1569 = vmul.f32 %v1566, %v1568
      %v1570 = vsub.f32 1.0, %v1569
      %v1571 = vmul.f32 %v1568, %v1570
      %v1572 = vadd.f32 %v1568, %v1571
      %vm1573 = vweird.f32 %v1566
      %vm1574 = vweird.f32 %v1568
      %vm1575 = vmor %vm1573, %vm1574
      %v1576 = vsel %vm1575, %v1568, %v1572
      %v1577 = vand.u32 2147483647, %v1566
      %vm1578 = vcmp.eq.f32.partialorder %v1577, 8.507059e+37
      %v1579 = vand.u32 %v1566, 2147483648
      %v1580 = vor.u32 1.1754944e-38, %v1579
      %v1581 = vsel %vm1578, %v1580, %v1576
      %v1582 = vmul.f32 1.0, %v1581
      %v1583 = vrcp.pop %v1567
      %v1584 = vmul.f32 %v1567, %v1583
      %v1585 = vsub.f32 1.0, %v1584
      %v1586 = vmul.f32 %v1583, %v1585
      %v1587 = vadd.f32 %v1583, %v1586
      %vm1588 = vweird.f32 %v1567
      %vm1589 = vweird.f32 %v1583
      %vm1590 = vmor %vm1588, %vm1589
      %v1591 = vsel %vm1590, %v1583, %v1587
      %v1592 = vand.u32 2147483647, %v1567
      %vm1593 = vcmp.eq.f32.partialorder %v1592, 8.507059e+37
      %v1594 = vand.u32 %v1567, 2147483648
      %v1595 = vor.u32 1.1754944e-38, %v1594
      %v1596 = vsel %vm1593, %v1595, %v1591
      %v1597 = vmul.f32 1.0, %v1596
      %v1598 = vtanh.pop %v1558
      %v1599 = vtanh.pop %v1559
      %v1600 = vmul.f32 %v1582, %v1409
      %v1601 = vmul.f32 %v1597, %v1410
      %1604 = vrot.lane.b32.xlu0 %v1598, 64
      %v1605 = vpop.permute.xlu0 %1604
      %1606 = vrot.lane.b32.xlu0 %v1599, 64
      %v1607 = vpop.permute.xlu0 %1606
      %v1610 = vmul.f32 %v1582, %v1605
      %v1611 = vmul.f32 %v1597, %v1607
      %1614 = vrot.lane.b32.xlu0 %v1610, 32
      %v1615 = vpop.permute.xlu0 %1614
      %1616 = vrot.lane.b32.xlu0 %v1611, 32
      %v1617 = vpop.permute.xlu0 %1616
      %v1620 = vadd.f32 %v1600, %v1615
      %v1621 = vadd.f32 %v1601, %v1617
      %v1622 = vtanh.pop %v1620
      %v1623 = vtanh.pop %v1621
      %1626 = vrot.lane.b32.xlu0 %v1622, 64
      %v1627 = vpop.permute.xlu0 %1626
      %1628 = vrot.lane.b32.xlu0 %v1623, 64
      %v1629 = vpop.permute.xlu0 %1628
      %v1632 = vmul.f32 %v1582, %v1627
      %v1633 = vmul.f32 %v1597, %v1629
      %vm1634 = vcmask 1048320
      %v1635 = vsel %vm1634, %v1632, 0.0
      %v1636 = vsel %vm1634, %v1633, 0.0
      %v1637 = vadd.f32 %v1635, %v1636
      %v1638 = vrot.slane %v1637, 4
      %v1639 = vadd.f32 %v1637, %v1638
      %v1640 = vrot.slane %v1639, 2
      %v1641 = vadd.f32 %v1639, %v1640
      %v1642 = vrot.slane %v1641, 1
      %v1643 = vadd.f32 %v1641, %v1642
      %v1644 = vrcp.pop 16.0
      %v1645 = vmul.f32 16.0, %v1644
      %v1646 = vsub.f32 1.0, %v1645
      %v1647 = vmul.f32 %v1644, %v1646
      %v1648 = vadd.f32 %v1644, %v1647
      %vm1649 = vweird.f32 %v1644
      %v1650 = vsel %vm1649, %v1644, %v1648
      %v1651 = vmul.f32 %v1643, %v1650
      %v1652 = vpack.c.bf16 %v1651, %v1651
      %v1653 = vld [vmem:[%s11] sm:$0xf]
      %v1654 = vld [vmem:[%s11 + $0x4] sm:$0xf]
      %v1655 = vld [vmem:[%s11 + $0x8] sm:$0xf]
      %v1656 = vld [vmem:[%s11 + $0xc] sm:$0xf]
      %v1657 = vld [vmem:[%s12] sm:$0x1]
      %1659 = vrot.lane.b32.xlu0 %v1652, 32
      %v1660 = vpop.permute.xlu0 %1659
      %v1665 = vunpack.c.l.b16 %v1653
      %v1666 = vunpack.c.l.b16 %v1654
      %v1667 = vunpack.c.l.b16 %v1655
      %v1668 = vunpack.c.l.b16 %v1656
      %v1669 = vpack.c.b16 %v1666, %v1665
      %v1670 = vpack.c.b16 %v1668, %v1667
      %v1674 = vsel %vm693, %v1660, 0
      %1676 = vmatpush.bf16.msra.mxu0 0
      %1677 = vmatpush.bf16.msra.mxu0 0
      %1678 = vmatpush.bf16.msra.mxu0 0
      %1679 = vmatpush.bf16.msra.mxu0 0
      %1680 = vmatpush.bf16.msra.mxu0 0
      %1681 = vmatpush.bf16.msra.mxu0 0
      %1682 = vmatpush.bf16.msra.mxu0 %v1670
      %1683 = vmatpush.bf16.msra.mxu0 %v1669
      %1684 = vmatmul.bf16.gmra.mxu0 %v1674
      %v1685 = vpop.f32.mrf.mxu0
      %v1686 = vadd.f32 %v1657, %v1685
      %v1687 = vpop.f32.mrf.mxu0
      %1688 = vdwg.mxu0
      %v1689 = vmax.f32 %v1686, 0.0
      %v1690 = vpack.c.bf16 %v1689, %v1689
      %v1691 = vld [vmem:[%s13] sm:$0xf]
      %v1692 = vld [vmem:[%s13 + $0x4] sm:$0xf]
      %v1693 = vld [vmem:[%s13 + $0x8] sm:$0xf]
      %v1694 = vld [vmem:[%s13 + $0xc] sm:$0xf]
      %v1695 = vld [vmem:[%s14] sm:$0x1]
      %v1700 = vunpack.c.l.b16 %v1691
      %v1701 = vunpack.c.l.b16 %v1692
      %v1702 = vunpack.c.l.b16 %v1693
      %v1703 = vunpack.c.l.b16 %v1694
      %v1704 = vpack.c.b16 %v1701, %v1700
      %v1705 = vpack.c.b16 %v1703, %v1702
      %v1709 = vsel %vm693, %v1690, 0
      %1711 = vmatpush.bf16.msra.mxu0 0
      %1712 = vmatpush.bf16.msra.mxu0 0
      %1713 = vmatpush.bf16.msra.mxu0 0
      %1714 = vmatpush.bf16.msra.mxu0 0
      %1715 = vmatpush.bf16.msra.mxu0 0
      %1716 = vmatpush.bf16.msra.mxu0 0
      %1717 = vmatpush.bf16.msra.mxu0 %v1705
      %1718 = vmatpush.bf16.msra.mxu0 %v1704
      %1719 = vmatmul.bf16.gmra.mxu0 %v1709
      %v1720 = vpop.f32.mrf.mxu0
      %v1721 = vadd.f32 %v1695, %v1720
      %v1722 = vpop.f32.mrf.mxu0
      %1723 = vdwg.mxu0
      %1724 = vst [vmem:[%s490] sm:$0x1] %v1721
      %p1725 = scmp.lt.s32.totalorder %s26, 1
      %s1726 = scalar_select %p1725, %s26, 1
      %s1727 = scalar_lea.vmem %s15, %s1726
      // Predicated region
      $region81: #{surel_forward.1} parent=79 // pred_check
        %p1728 = pneg %p364
      $region82: #{surel_forward.1} parent=79 // pred_check_branch
        %1730 = sbr.rel (%p1728) target = $region84
      $region83: #{surel_forward.1} parent=79 // pred_region
        _
      $region84: #{surel_forward.1} parent=79 // pred_fallthru
        _
    $region80: #{surel_forward.1} parent=5 // pred_fallthru
      _
    %p1731 = scmp.le.s32.totalorder 2, %s21
    // Predicated region
    $region85: #{surel_forward.1} parent=5 // pred_check
      %p1732 = pneg %p1731
    $region86: #{surel_forward.1} parent=5 // pred_check_branch
      %1734 = sbr.rel (%p1732) target = $region88
    $region87: #{surel_forward.1} parent=5 // pred_region
      %s1735 = ssub.s32 %s21, 2
      // Predicated region
      $region89: #{surel_forward.1} parent=87 // pred_check
        %p1736 = pneg %p370
      $region90: #{surel_forward.1} parent=87 // pred_check_branch
        %1738 = sbr.rel (%p1736) target = $region92
      $region91: #{surel_forward.1} parent=87 // pred_region
        %p1739 = scmp.lt.s32.totalorder %s27, 1
        %s1740 = scalar_select %p1739, %s27, 1
        %s1741 = scalar_lea.vmem %s15, %s1740
      $region92: #{surel_forward.1} parent=87 // pred_fallthru
        _
    $region88: #{surel_forward.1} parent=5 // pred_fallthru
      _
  $region6: #{surel_forward.1} parent=0 // loop_footer
    %s25 = sadd.s32 1, %s21
  $region7: #{surel_forward.1} parent=0 // loop_footer_branch
    %20 = sbr.rel target = $region3
  $region8: #{surel_forward.1} parent=0 // loop_exit
    _

</llo_original>
